<compile_context>
chip_gen: v7x
topology: tpu7x:2x2x1
jax: 0.10.0
libtpu: 0.0.40
codegen_flags: <defaults>
</compile_context>

<pallas_src>
import jax
import jax.numpy as jnp
from jax import lax
from jax.experimental import pallas as pl
from jax.experimental.pallas import tpu as pltpu

N = 2                  # batch
H0 = W0 = 11           # input spatial size (so that flatten gives 1024 features)
C1 = 8                 # conv1 out channels
C2 = 16                # conv2 out channels
H1 = W1 = 10           # after 2x2 conv, stride 1
H2 = W2 = 8            # after 3x3 conv, stride 1
NCLASS = 5
BN_EPS = 1e-5


# ----------------------------------------------------------------------------
# Packed-parameter layout: one (PACK_ROWS, 128) f32 array.  Each segment is
# zero-padded on the right and its start row is rounded up to a multiple of 8,
# so every in-kernel slice is sublane-aligned.
# ----------------------------------------------------------------------------
def _build_layout():
    segs = (
        ("e2_0",  (W1 * C1, W2 * C2)),    # (80, 128)  conv2 structured weight, kh tap 0
        ("e2_1",  (W1 * C1, W2 * C2)),    # (80, 128)
        ("e2_2",  (W1 * C1, W2 * C2)),    # (80, 128)
        ("wbd",   (W2 * C2, H2 * NCLASS)),# (128, 40)  FC weight, torch (C,H,W) flatten baked in
        ("fold2", (W2 * C2, C2)),         # (128, 16)  SE2 avg-pool column fold (1/64 baked in)
        ("fold1", (W1 * C1, C1)),         # (80, 8)    SE1 avg-pool column fold (1/100 baked in)
        ("g1_0",  (N * H1, N * H0)),      # (20, 22)   conv1 row-window gather, kh tap 0
        ("g1_1",  (N * H1, N * H0)),      # (20, 22)
        ("g2_0",  (N * H2, N * H1)),      # (16, 20)   conv2 row-window gather
        ("g2_1",  (N * H2, N * H1)),      # (16, 20)
        ("g2_2",  (N * H2, N * H1)),      # (16, 20)
        ("e1_0",  (W0, W1 * C1)),         # (11, 80)   conv1 structured weight, kh tap 0
        ("e1_1",  (W0, W1 * C1)),         # (11, 80)
        ("rcol1", (C1, W1 * C1)),         # (8, 80)    SE1 gate -> per-column expansion
        ("rcol2", (C2, W2 * C2)),         # (16, 128)  SE2 gate -> per-column expansion
        ("rexp1", (N * H1, N)),           # (20, 2)    per-batch row broadcast
        ("rexp2", (N * H2, N)),           # (16, 2)
        ("psum1", (N, N * H1)),           # (2, 20)    per-batch row sum
        ("psum2", (N, N * H2)),           # (2, 16)
        ("mselB", (N * H2, H2 * NCLASS)), # (16, 40)   FC row/block selection mask
        ("csum",  (H2 * NCLASS, NCLASS)), # (40, 5)    collapse per-row FC blocks
        ("se1a",  (C1, C1 // 4)),         # (8, 2)
        ("se1b",  (C1 // 4, C1)),         # (2, 8)
        ("se2a",  (C2, C2 // 4)),         # (16, 4)
        ("se2b",  (C2 // 4, C2)),         # (4, 16)
        ("b1t",   (1, W1 * C1)),          # (1, 80)    conv1 bias tiled over W
        ("b2t",   (1, W2 * C2)),          # (1, 128)   conv2 bias tiled over W
        ("bnsc",  (1, W2 * C2)),          # (1, 128)   BN scale tiled over W
        ("bnsh",  (1, W2 * C2)),          # (1, 128)   BN shift tiled over W
        ("bfc",   (1, NCLASS)),           # (1, 5)
    )
    off = {}
    r = 0
    for name, (h, _w) in segs:
        off[name] = r
        r = ((r + h + 7) // 8) * 8
    return segs, off, r


_SEGS, _OFFSET, PACK_ROWS = _build_layout()
PACK_COLS = 128
_SHAPES = dict(_SEGS)


def _wseg(w_ref, name):
    """Static slice of the packed parameter array (trace-time offsets)."""
    r0 = _OFFSET[name]
    h, w = _SHAPES[name]
    return w_ref[r0:r0 + h, 0:w]


def _sigmoid(x):
    return 1.0 / (1.0 + jnp.exp(-x))


# ----------------------------------------------------------------------------
# Fused kernel: conv1 -> ReLU -> SE1 -> conv2 -> SE2 -> BN(eval) -> ReLU -> FC -> softmax
# Both batch items go through every matmul together.
# ----------------------------------------------------------------------------
def _se_kernel(x_ref, w_ref, o_ref):
    f32 = jnp.float32
    x = x_ref[...]                                               # (N*H0, W0) = (22, 11)

    # ---- Conv2d(1 -> 8, k=2) + bias + ReLU: 2 row-gather matmuls + 2 structured matmuls.
    # Layout of h1: rows = n*10 + i, cols = j*8 + c.
    acc1 = jnp.zeros((N * H1, W1 * C1), f32)
    for di in range(2):
        g = _wseg(w_ref, f"g1_{di}")                             # (20, 22)
        e = _wseg(w_ref, f"e1_{di}")                             # (11, 80)
        p = jnp.dot(g, x, preferred_element_type=f32)            # (20, 11) shifted row windows
        acc1 = acc1 + jnp.dot(p, e, preferred_element_type=f32)
    h1 = jnp.maximum(acc1 + _wseg(w_ref, "b1t"), 0.0)            # (20, 80)

    # ---- SE block 1 (channels=8, ratio=4): avg-pool -> FC -> ReLU -> FC -> sigmoid -> scale
    pooled1 = jnp.dot(jnp.dot(_wseg(w_ref, "psum1"), h1, preferred_element_type=f32),
                      _wseg(w_ref, "fold1"), preferred_element_type=f32)       # (2, 8)
    z1 = jnp.maximum(jnp.dot(pooled1, _wseg(w_ref, "se1a"),
                             preferred_element_type=f32), 0.0)                 # (2, 2)
    s1 = _sigmoid(jnp.dot(z1, _wseg(w_ref, "se1b"), preferred_element_type=f32))  # (2, 8)
    gate1 = jnp.dot(_wseg(w_ref, "rexp1"),
                    jnp.dot(s1, _wseg(w_ref, "rcol1"), preferred_element_type=f32),
                    preferred_element_type=f32)                                # (20, 80)
    h1 = h1 * gate1

    # ---- Conv2d(8 -> 16, k=3) + bias (no ReLU): 3 row-gather matmuls + 3 structured matmuls.
    # Layout of h2: rows = n*8 + i, cols = j*16 + o.
    acc2 = jnp.zeros((N * H2, W2 * C2), f32)
    for di in range(3):
        g = _wseg(w_ref, f"g2_{di}")                             # (16, 20)
        e = _wseg(w_ref, f"e2_{di}")                             # (80, 128)
        p = jnp.dot(g, h1, preferred_element_type=f32)           # (16, 80) shifted row windows
        acc2 = acc2 + jnp.dot(p, e, preferred_element_type=f32)
    h2 = acc2 + _wseg(w_ref, "b2t")                              # (16, 128)

    # ---- SE block 2 (channels=16, ratio=4)
    pooled2 = jnp.dot(jnp.dot(_wseg(w_ref, "psum2"), h2, preferred_element_type=f32),
                      _wseg(w_ref, "fold2"), preferred_element_type=f32)       # (2, 16)
    z2 = jnp.maximum(jnp.dot(pooled2, _wseg(w_ref, "se2a"),
                             preferred_element_type=f32), 0.0)                 # (2, 4)
    s2 = _sigmoid(jnp.dot(z2, _wseg(w_ref, "se2b"), preferred_element_type=f32))  # (2, 16)
    gate2 = jnp.dot(_wseg(w_ref, "rexp2"),
                    jnp.dot(s2, _wseg(w_ref, "rcol2"), preferred_element_type=f32),
                    preferred_element_type=f32)                                # (16, 128)
    h2 = h2 * gate2

    # ---- BatchNorm2d(16) (eval running stats folded into scale/shift) + ReLU
    # TODO(synk): training-mode batch statistics not implemented (eval running stats used).
    h2 = jnp.maximum(h2 * _wseg(w_ref, "bnsc") + _wseg(w_ref, "bnsh"), 0.0)    # (16, 128)

    # ---- Flatten (torch C,H,W order baked into wbd) -> Linear(1024,5) -> Softmax
    # TODO(synk): nn.Dropout(0.1) is identity in eval mode; training-mode dropout not implemented.
    t = jnp.dot(h2, _wseg(w_ref, "wbd"), preferred_element_type=f32)           # (16, 40)
    t = t * _wseg(w_ref, "mselB")                                              # keep row-matching block
    gsum = jnp.dot(_wseg(w_ref, "psum2"), t, preferred_element_type=f32)       # (2, 40)
    logits = jnp.dot(gsum, _wseg(w_ref, "csum"),
                     preferred_element_type=f32) + _wseg(w_ref, "bfc")         # (2, 5)
    m = jnp.max(logits, axis=1, keepdims=True)
    e = jnp.exp(logits - m)
    o_ref[...] = e / jnp.sum(e, axis=1, keepdims=True)


def se_forward(x_nchw, packed_params):
    # Free reshape (contiguous, C=1): (N, 1, 11, 11) -> (N*11, 11).  No transpose.
    x2 = x_nchw.astype(jnp.float32).reshape(N * H0, W0)
    return pl.pallas_call(
        _se_kernel,
        out_shape=jax.ShapeDtypeStruct((N, NCLASS), jnp.float32),
        in_specs=[pl.BlockSpec(memory_space=pltpu.MemorySpace.VMEM),
                  pl.BlockSpec(memory_space=pltpu.MemorySpace.VMEM)],
        out_specs=pl.BlockSpec(memory_space=pltpu.MemorySpace.VMEM),
    )(x2, packed_params)


# ----------------------------------------------------------------------------
# Parameter construction (torch-layout raw params + packed structured weights)
# ----------------------------------------------------------------------------
def init_raw_params(key):
    keys = jax.random.split(key, 10)

    def u(k, shape, fan_in):
        bound = 1.0 / (fan_in ** 0.5)
        return jax.random.uniform(k, shape, jnp.float32, -bound, bound)

    return dict(
        w1=u(keys[0], (C1, 1, 2, 2), 1 * 2 * 2),        # Conv2d(1, 8, 2)
        b1=u(keys[1], (C1,), 1 * 2 * 2),
        se1_w1=u(keys[2], (C1 // 4, C1), C1),           # Linear(8 -> 2), no bias
        se1_w2=u(keys[3], (C1, C1 // 4), C1 // 4),      # Linear(2 -> 8), no bias
        w2=u(keys[4], (C2, C1, 3, 3), C1 * 3 * 3),      # Conv2d(8, 16, 3)
        b2=u(keys[5], (C2,), C1 * 3 * 3),
        se2_w1=u(keys[6], (C2 // 4, C2), C2),           # Linear(16 -> 4), no bias
        se2_w2=u(keys[7], (C2, C2 // 4), C2 // 4),      # Linear(4 -> 16), no bias
        gamma=jnp.ones((C2,), jnp.float32),             # BatchNorm2d(16), default init
        beta=jnp.zeros((C2,), jnp.float32),
        mean=jnp.zeros((C2,), jnp.float32),
        var=jnp.ones((C2,), jnp.float32),
        wfc=u(keys[8], (NCLASS, 1024), 1024),           # Linear(1024, 5)
        bfc=u(keys[9], (NCLASS,), 1024),
    )


def build_packed(raw):
    eye = lambda n: jnp.eye(n, dtype=jnp.float32)
    ones = lambda s: jnp.ones(s, jnp.float32)
    mats = {}

    # conv1 structured weights: e1_di[jin, j*8+c] = w1[c, 0, di, jin - j] for jin - j in {0, 1}
    for di in range(2):
        blk = jnp.zeros((W0, W1 * C1), jnp.float32)
        for dj in range(2):
            kb = jnp.kron(eye(W1), raw["w1"][:, 0, di, dj][None, :])    # (10, 80)
            blk = blk.at[dj:dj + W1, :].add(kb)
        mats[f"e1_{di}"] = blk

    # conv2 structured weights: e2_di[jin*8+c, j*16+o] = w2[o, c, di, jin - j] for jin - j in {0,1,2}
    for di in range(3):
        blk = jnp.zeros((W1 * C1, W2 * C2), jnp.float32)
        for dj in range(3):
            kb = jnp.kron(eye(W2), raw["w2"][:, :, di, dj].T)           # (64, 128)
            blk = blk.at[dj * C1:dj * C1 + W2 * C1, :].add(kb)
        mats[f"e2_{di}"] = blk

    # row-window gather matrices (per kernel-height tap, both batch items stacked)
    def gather(n_out, n_in, idx):
        return jnp.zeros((n_out, n_in), jnp.float32).at[
            jnp.arange(n_out), jnp.asarray(idx, jnp.int32)].set(1.0)

    for di in range(2):
        idx = [n * H0 + i + di for n in range(N) for i in range(H1)]
        mats[f"g1_{di}"] = gather(N * H1, N * H0, idx)
    for di in range(3):
        idx = [n * H1 + i + di for n in range(N) for i in range(H2)]
        mats[f"g2_{di}"] = gather(N * H2, N * H1, idx)

    mats["b1t"] = jnp.tile(raw["b1"][None, :], (1, W1))
    mats["b2t"] = jnp.tile(raw["b2"][None, :], (1, W2))
    mats["rcol1"] = jnp.tile(eye(C1), (1, W1))
    mats["rcol2"] = jnp.tile(eye(C2), (1, W2))
    mats["fold1"] = jnp.kron(ones((W1, 1)), eye(C1)) / float(H1 * W1)
    mats["fold2"] = jnp.kron(ones((W2, 1)), eye(C2)) / float(H2 * W2)
    mats["psum1"] = jnp.kron(eye(N), ones((1, H1)))
    mats["psum2"] = jnp.kron(eye(N), ones((1, H2)))
    mats["rexp1"] = jnp.kron(eye(N), ones((H1, 1)))
    mats["rexp2"] = jnp.kron(eye(N), ones((H2, 1)))
    mats["se1a"] = raw["se1_w1"].T                      # (8, 2)
    mats["se1b"] = raw["se1_w2"].T                      # (2, 8)
    mats["se2a"] = raw["se2_w1"].T                      # (16, 4)
    mats["se2b"] = raw["se2_w2"].T                      # (4, 16)

    scale = raw["gamma"] / jnp.sqrt(raw["var"] + BN_EPS)
    shift = raw["beta"] - raw["mean"] * scale
    mats["bnsc"] = jnp.tile(scale[None, :], (1, W2))
    mats["bnsh"] = jnp.tile(shift[None, :], (1, W2))

    # FC with torch (C, H, W) flatten order baked in:
    #   wbd[j*16 + o, i*5 + cls] = wfc[cls, o*64 + i*8 + j]
    mats["wbd"] = jnp.transpose(raw["wfc"].reshape(NCLASS, C2, H2, W2),
                                (3, 1, 2, 0)).reshape(W2 * C2, H2 * NCLASS)
    mats["mselB"] = jnp.tile(jnp.kron(eye(H2), ones((1, NCLASS))), (N, 1))
    mats["csum"] = jnp.tile(eye(NCLASS), (H2, 1))
    mats["bfc"] = raw["bfc"][None, :]

    packed = jnp.zeros((PACK_ROWS, PACK_COLS), jnp.float32)
    for name, (h, w) in _SEGS:
        m = mats[name].astype(jnp.float32)
        assert m.shape == (h, w), (name, m.shape, (h, w))
        packed = packed.at[_OFFSET[name]:_OFFSET[name] + h, 0:w].set(m)
    return packed


# ----------------------------------------------------------------------------
# Pure-JAX (non-Pallas) reference of the PyTorch module, for self-check.
# ----------------------------------------------------------------------------
def _reference_forward(x, raw):
    dn = ("NCHW", "OIHW", "NCHW")
    y = lax.conv_general_dilated(x, raw["w1"], (1, 1), "VALID", dimension_numbers=dn)
    y = jnp.maximum(y + raw["b1"][None, :, None, None], 0.0)
    p = jnp.mean(y, axis=(2, 3))
    z = jnp.maximum(p @ raw["se1_w1"].T, 0.0)
    s = jax.nn.sigmoid(z @ raw["se1_w2"].T)
    y = y * s[:, :, None, None]
    y = lax.conv_general_dilated(y, raw["w2"], (1, 1), "VALID", dimension_numbers=dn)
    y = y + raw["b2"][None, :, None, None]
    p = jnp.mean(y, axis=(2, 3))
    z = jnp.maximum(p @ raw["se2_w1"].T, 0.0)
    s = jax.nn.sigmoid(z @ raw["se2_w2"].T)
    y = y * s[:, :, None, None]
    scale = raw["gamma"] / jnp.sqrt(raw["var"] + BN_EPS)
    shift = raw["beta"] - raw["mean"] * scale
    y = jnp.maximum(y * scale[None, :, None, None] + shift[None, :, None, None], 0.0)
    flat = y.reshape(y.shape[0], -1)                     # NCHW flatten (C, H, W)
    logits = flat @ raw["wfc"].T + raw["bfc"]
    return jax.nn.softmax(logits, axis=1)


if __name__ == "__main__":
    key = jax.random.PRNGKey(0)
    k_x, k_p = jax.random.split(key)
    x = jax.random.normal(k_x, (N, 1, H0, W0), jnp.float32)   # NCHW, like the PyTorch module
    raw = init_raw_params(k_p)
    packed = build_packed(raw)

    out = jax.jit(se_forward)(x, packed)
    out = jax.block_until_ready(out)

    ref = _reference_forward(x, raw)

    assert out.shape == (N, NCLASS)
    assert bool(jnp.all(jnp.isfinite(out)))
    assert bool(jnp.allclose(jnp.sum(out, axis=1), 1.0, atol=1e-5))
    assert bool(jnp.allclose(out, ref, atol=1e-4, rtol=1e-3))
    print("KERNEL_OK")
</pallas_src>

<mosaic_0001>
module attributes {stable_mosaic.version = 11 : i64} {
  func.func @_se_kernel(%arg0: memref<22x11xf32, #tpu.memory_space<vmem>>, %arg1: memref<920x128xf32, #tpu.memory_space<vmem>>, %arg2: memref<2x5xf32, #tpu.memory_space<vmem>>) attributes {dimension_semantics = [], scalar_prefetch = 0 : i64, scratch_operands = 0 : i64, tpu.core_type = #tpu.core_type<tc>} {
    %c0 = arith.constant 0 : index
    %c0_0 = arith.constant 0 : index
    %0 = vector.load %arg0[%c0, %c0_0] : memref<22x11xf32, #tpu.memory_space<vmem>>, vector<22x11xf32>
    %cst = arith.constant 0.000000e+00 : f32
    %1 = vector.broadcast %cst : f32 to vector<20x80xf32>
    %c576 = arith.constant 576 : index
    %c0_1 = arith.constant 0 : index
    %2 = vector.load %arg1[%c576, %c0_1] : memref<920x128xf32, #tpu.memory_space<vmem>>, vector<20x22xf32>
    %c672 = arith.constant 672 : index
    %c0_2 = arith.constant 0 : index
    %3 = vector.load %arg1[%c672, %c0_2] : memref<920x128xf32, #tpu.memory_space<vmem>>, vector<11x80xf32>
    %cst_3 = arith.constant dense<0.000000e+00> : vector<20x11xf32>
    %4 = tpu.matmul %2, %0, %cst_3 {dimension_numbers = #tpu.dot_dimension_numbers<[1], [0], [0], [1], [0, 0, 1, 1], [], []>} : vector<20x22xf32>, vector<22x11xf32>, vector<20x11xf32> -> vector<20x11xf32>
    %cst_4 = arith.constant dense<0.000000e+00> : vector<20x80xf32>
    %5 = tpu.matmul %4, %3, %cst_4 {dimension_numbers = #tpu.dot_dimension_numbers<[1], [0], [0], [1], [0, 0, 1, 1], [], []>} : vector<20x11xf32>, vector<11x80xf32>, vector<20x80xf32> -> vector<20x80xf32>
    %6 = arith.addf %1, %5 : vector<20x80xf32>
    %c600 = arith.constant 600 : index
    %c0_5 = arith.constant 0 : index
    %7 = vector.load %arg1[%c600, %c0_5] : memref<920x128xf32, #tpu.memory_space<vmem>>, vector<20x22xf32>
    %c688 = arith.constant 688 : index
    %c0_6 = arith.constant 0 : index
    %8 = vector.load %arg1[%c688, %c0_6] : memref<920x128xf32, #tpu.memory_space<vmem>>, vector<11x80xf32>
    %cst_7 = arith.constant dense<0.000000e+00> : vector<20x11xf32>
    %9 = tpu.matmul %7, %0, %cst_7 {dimension_numbers = #tpu.dot_dimension_numbers<[1], [0], [0], [1], [0, 0, 1, 1], [], []>} : vector<20x22xf32>, vector<22x11xf32>, vector<20x11xf32> -> vector<20x11xf32>
    %cst_8 = arith.constant dense<0.000000e+00> : vector<20x80xf32>
    %10 = tpu.matmul %9, %8, %cst_8 {dimension_numbers = #tpu.dot_dimension_numbers<[1], [0], [0], [1], [0, 0, 1, 1], [], []>} : vector<20x11xf32>, vector<11x80xf32>, vector<20x80xf32> -> vector<20x80xf32>
    %11 = arith.addf %6, %10 : vector<20x80xf32>
    %c880 = arith.constant 880 : index
    %c0_9 = arith.constant 0 : index
    %12 = vector.load %arg1[%c880, %c0_9] : memref<920x128xf32, #tpu.memory_space<vmem>>, vector<1x80xf32>
    %13 = vector.broadcast %12 : vector<1x80xf32> to vector<20x80xf32>
    %14 = arith.addf %11, %13 : vector<20x80xf32>
    %cst_10 = arith.constant 0.000000e+00 : f32
    %15 = vector.broadcast %cst_10 : f32 to vector<20x80xf32>
    %16 = arith.maximumf %14, %15 : vector<20x80xf32>
    %c768 = arith.constant 768 : index
    %c0_11 = arith.constant 0 : index
    %17 = vector.load %arg1[%c768, %c0_11] : memref<920x128xf32, #tpu.memory_space<vmem>>, vector<2x20xf32>
    %cst_12 = arith.constant dense<0.000000e+00> : vector<2x80xf32>
    %18 = tpu.matmul %17, %16, %cst_12 {dimension_numbers = #tpu.dot_dimension_numbers<[1], [0], [0], [1], [0, 0, 1, 1], [], []>} : vector<2x20xf32>, vector<20x80xf32>, vector<2x80xf32> -> vector<2x80xf32>
    %c496 = arith.constant 496 : index
    %c0_13 = arith.constant 0 : index
    %19 = vector.load %arg1[%c496, %c0_13] : memref<920x128xf32, #tpu.memory_space<vmem>>, vector<80x8xf32>
    %cst_14 = arith.constant dense<0.000000e+00> : vector<2x8xf32>
    %20 = tpu.matmul %18, %19, %cst_14 {dimension_numbers = #tpu.dot_dimension_numbers<[1], [0], [0], [1], [0, 0, 1, 1], [], []>} : vector<2x80xf32>, vector<80x8xf32>, vector<2x8xf32> -> vector<2x8xf32>
    %c840 = arith.constant 840 : index
    %c0_15 = arith.constant 0 : index
    %21 = vector.load %arg1[%c840, %c0_15] : memref<920x128xf32, #tpu.memory_space<vmem>>, vector<8x2xf32>
    %cst_16 = arith.constant dense<0.000000e+00> : vector<2x2xf32>
    %22 = tpu.matmul %20, %21, %cst_16 {dimension_numbers = #tpu.dot_dimension_numbers<[1], [0], [0], [1], [0, 0, 1, 1], [], []>} : vector<2x8xf32>, vector<8x2xf32>, vector<2x2xf32> -> vector<2x2xf32>
    %cst_17 = arith.constant 0.000000e+00 : f32
    %23 = vector.broadcast %cst_17 : f32 to vector<2x2xf32>
    %24 = arith.maximumf %22, %23 : vector<2x2xf32>
    %c848 = arith.constant 848 : index
    %c0_18 = arith.constant 0 : index
    %25 = vector.load %arg1[%c848, %c0_18] : memref<920x128xf32, #tpu.memory_space<vmem>>, vector<2x8xf32>
    %cst_19 = arith.constant dense<0.000000e+00> : vector<2x8xf32>
    %26 = tpu.matmul %24, %25, %cst_19 {dimension_numbers = #tpu.dot_dimension_numbers<[1], [0], [0], [1], [0, 0, 1, 1], [], []>} : vector<2x2xf32>, vector<2x8xf32>, vector<2x8xf32> -> vector<2x8xf32>
    %cst_20 = arith.constant 0.000000e+00 : f32
    %27 = vector.broadcast %cst_20 : f32 to vector<2x8xf32>
    %28 = arith.subf %27, %26 : vector<2x8xf32>
    %29 = math.exp %28 : vector<2x8xf32>
    %cst_21 = arith.constant 1.000000e+00 : f32
    %30 = vector.broadcast %cst_21 : f32 to vector<2x8xf32>
    %31 = arith.addf %30, %29 : vector<2x8xf32>
    %cst_22 = arith.constant 1.000000e+00 : f32
    %32 = vector.broadcast %cst_22 : f32 to vector<2x8xf32>
    %33 = arith.divf %32, %31 : vector<2x8xf32>
    %c728 = arith.constant 728 : index
    %c0_23 = arith.constant 0 : index
    %34 = vector.load %arg1[%c728, %c0_23] : memref<920x128xf32, #tpu.memory_space<vmem>>, vector<20x2xf32>
    %c704 = arith.constant 704 : index
    %c0_24 = arith.constant 0 : index
    %35 = vector.load %arg1[%c704, %c0_24] : memref<920x128xf32, #tpu.memory_space<vmem>>, vector<8x80xf32>
    %cst_25 = arith.constant dense<0.000000e+00> : vector<2x80xf32>
    %36 = tpu.matmul %33, %35, %cst_25 {dimension_numbers = #tpu.dot_dimension_numbers<[1], [0], [0], [1], [0, 0, 1, 1], [], []>} : vector<2x8xf32>, vector<8x80xf32>, vector<2x80xf32> -> vector<2x80xf32>
    %cst_26 = arith.constant dense<0.000000e+00> : vector<20x80xf32>
    %37 = tpu.matmul %34, %36, %cst_26 {dimension_numbers = #tpu.dot_dimension_numbers<[1], [0], [0], [1], [0, 0, 1, 1], [], []>} : vector<20x2xf32>, vector<2x80xf32>, vector<20x80xf32> -> vector<20x80xf32>
    %38 = arith.mulf %16, %37 : vector<20x80xf32>
    %cst_27 = arith.constant 0.000000e+00 : f32
    %39 = vector.broadcast %cst_27 : f32 to vector<16x128xf32>
    %c624 = arith.constant 624 : index
    %c0_28 = arith.constant 0 : index
    %40 = vector.load %arg1[%c624, %c0_28] : memref<920x128xf32, #tpu.memory_space<vmem>>, vector<16x20xf32>
    %c0_29 = arith.constant 0 : index
    %c0_30 = arith.constant 0 : index
    %41 = vector.load %arg1[%c0_29, %c0_30] : memref<920x128xf32, #tpu.memory_space<vmem>>, vector<80x128xf32>
    %cst_31 = arith.constant dense<0.000000e+00> : vector<16x80xf32>
    %42 = tpu.matmul %40, %38, %cst_31 {dimension_numbers = #tpu.dot_dimension_numbers<[1], [0], [0], [1], [0, 0, 1, 1], [], []>} : vector<16x20xf32>, vector<20x80xf32>, vector<16x80xf32> -> vector<16x80xf32>
    %cst_32 = arith.constant dense<0.000000e+00> : vector<16x128xf32>
    %43 = tpu.matmul %42, %41, %cst_32 {dimension_numbers = #tpu.dot_dimension_numbers<[1], [0], [0], [1], [0, 0, 1, 1], [], []>} : vector<16x80xf32>, vector<80x128xf32>, vector<16x128xf32> -> vector<16x128xf32>
    %44 = arith.addf %39, %43 : vector<16x128xf32>
    %c640 = arith.constant 640 : index
    %c0_33 = arith.constant 0 : index
    %45 = vector.load %arg1[%c640, %c0_33] : memref<920x128xf32, #tpu.memory_space<vmem>>, vector<16x20xf32>
    %c80 = arith.constant 80 : index
    %c0_34 = arith.constant 0 : index
    %46 = vector.load %arg1[%c80, %c0_34] : memref<920x128xf32, #tpu.memory_space<vmem>>, vector<80x128xf32>
    %cst_35 = arith.constant dense<0.000000e+00> : vector<16x80xf32>
    %47 = tpu.matmul %45, %38, %cst_35 {dimension_numbers = #tpu.dot_dimension_numbers<[1], [0], [0], [1], [0, 0, 1, 1], [], []>} : vector<16x20xf32>, vector<20x80xf32>, vector<16x80xf32> -> vector<16x80xf32>
    %cst_36 = arith.constant dense<0.000000e+00> : vector<16x128xf32>
    %48 = tpu.matmul %47, %46, %cst_36 {dimension_numbers = #tpu.dot_dimension_numbers<[1], [0], [0], [1], [0, 0, 1, 1], [], []>} : vector<16x80xf32>, vector<80x128xf32>, vector<16x128xf32> -> vector<16x128xf32>
    %49 = arith.addf %44, %48 : vector<16x128xf32>
    %c656 = arith.constant 656 : index
    %c0_37 = arith.constant 0 : index
    %50 = vector.load %arg1[%c656, %c0_37] : memref<920x128xf32, #tpu.memory_space<vmem>>, vector<16x20xf32>
    %c160 = arith.constant 160 : index
    %c0_38 = arith.constant 0 : index
    %51 = vector.load %arg1[%c160, %c0_38] : memref<920x128xf32, #tpu.memory_space<vmem>>, vector<80x128xf32>
    %cst_39 = arith.constant dense<0.000000e+00> : vector<16x80xf32>
    %52 = tpu.matmul %50, %38, %cst_39 {dimension_numbers = #tpu.dot_dimension_numbers<[1], [0], [0], [1], [0, 0, 1, 1], [], []>} : vector<16x20xf32>, vector<20x80xf32>, vector<16x80xf32> -> vector<16x80xf32>
    %cst_40 = arith.constant dense<0.000000e+00> : vector<16x128xf32>
    %53 = tpu.matmul %52, %51, %cst_40 {dimension_numbers = #tpu.dot_dimension_numbers<[1], [0], [0], [1], [0, 0, 1, 1], [], []>} : vector<16x80xf32>, vector<80x128xf32>, vector<16x128xf32> -> vector<16x128xf32>
    %54 = arith.addf %49, %53 : vector<16x128xf32>
    %c888 = arith.constant 888 : index
    %c0_41 = arith.constant 0 : index
    %55 = vector.load %arg1[%c888, %c0_41] : memref<920x128xf32, #tpu.memory_space<vmem>>, vector<1x128xf32>
    %56 = vector.broadcast %55 : vector<1x128xf32> to vector<16x128xf32>
    %57 = arith.addf %54, %56 : vector<16x128xf32>
    %c776 = arith.constant 776 : index
    %c0_42 = arith.constant 0 : index
    %58 = vector.load %arg1[%c776, %c0_42] : memref<920x128xf32, #tpu.memory_space<vmem>>, vector<2x16xf32>
    %cst_43 = arith.constant dense<0.000000e+00> : vector<2x128xf32>
    %59 = tpu.matmul %58, %57, %cst_43 {dimension_numbers = #tpu.dot_dimension_numbers<[1], [0], [0], [1], [0, 0, 1, 1], [], []>} : vector<2x16xf32>, vector<16x128xf32>, vector<2x128xf32> -> vector<2x128xf32>
    %c368 = arith.constant 368 : index
    %c0_44 = arith.constant 0 : index
    %60 = vector.load %arg1[%c368, %c0_44] : memref<920x128xf32, #tpu.memory_space<vmem>>, vector<128x16xf32>
    %cst_45 = arith.constant dense<0.000000e+00> : vector<2x16xf32>
    %61 = tpu.matmul %59, %60, %cst_45 {dimension_numbers = #tpu.dot_dimension_numbers<[1], [0], [0], [1], [0, 0, 1, 1], [], []>} : vector<2x128xf32>, vector<128x16xf32>, vector<2x16xf32> -> vector<2x16xf32>
    %c856 = arith.constant 856 : index
    %c0_46 = arith.constant 0 : index
    %62 = vector.load %arg1[%c856, %c0_46] : memref<920x128xf32, #tpu.memory_space<vmem>>, vector<16x4xf32>
    %cst_47 = arith.constant dense<0.000000e+00> : vector<2x4xf32>
    %63 = tpu.matmul %61, %62, %cst_47 {dimension_numbers = #tpu.dot_dimension_numbers<[1], [0], [0], [1], [0, 0, 1, 1], [], []>} : vector<2x16xf32>, vector<16x4xf32>, vector<2x4xf32> -> vector<2x4xf32>
    %cst_48 = arith.constant 0.000000e+00 : f32
    %64 = vector.broadcast %cst_48 : f32 to vector<2x4xf32>
    %65 = arith.maximumf %63, %64 : vector<2x4xf32>
    %c872 = arith.constant 872 : index
    %c0_49 = arith.constant 0 : index
    %66 = vector.load %arg1[%c872, %c0_49] : memref<920x128xf32, #tpu.memory_space<vmem>>, vector<4x16xf32>
    %cst_50 = arith.constant dense<0.000000e+00> : vector<2x16xf32>
    %67 = tpu.matmul %65, %66, %cst_50 {dimension_numbers = #tpu.dot_dimension_numbers<[1], [0], [0], [1], [0, 0, 1, 1], [], []>} : vector<2x4xf32>, vector<4x16xf32>, vector<2x16xf32> -> vector<2x16xf32>
    %cst_51 = arith.constant 0.000000e+00 : f32
    %68 = vector.broadcast %cst_51 : f32 to vector<2x16xf32>
    %69 = arith.subf %68, %67 : vector<2x16xf32>
    %70 = math.exp %69 : vector<2x16xf32>
    %cst_52 = arith.constant 1.000000e+00 : f32
    %71 = vector.broadcast %cst_52 : f32 to vector<2x16xf32>
    %72 = arith.addf %71, %70 : vector<2x16xf32>
    %cst_53 = arith.constant 1.000000e+00 : f32
    %73 = vector.broadcast %cst_53 : f32 to vector<2x16xf32>
    %74 = arith.divf %73, %72 : vector<2x16xf32>
    %c752 = arith.constant 752 : index
    %c0_54 = arith.constant 0 : index
    %75 = vector.load %arg1[%c752, %c0_54] : memref<920x128xf32, #tpu.memory_space<vmem>>, vector<16x2xf32>
    %c712 = arith.constant 712 : index
    %c0_55 = arith.constant 0 : index
    %76 = vector.load %arg1[%c712, %c0_55] : memref<920x128xf32, #tpu.memory_space<vmem>>, vector<16x128xf32>
    %cst_56 = arith.constant dense<0.000000e+00> : vector<2x128xf32>
    %77 = tpu.matmul %74, %76, %cst_56 {dimension_numbers = #tpu.dot_dimension_numbers<[1], [0], [0], [1], [0, 0, 1, 1], [], []>} : vector<2x16xf32>, vector<16x128xf32>, vector<2x128xf32> -> vector<2x128xf32>
    %cst_57 = arith.constant dense<0.000000e+00> : vector<16x128xf32>
    %78 = tpu.matmul %75, %77, %cst_57 {dimension_numbers = #tpu.dot_dimension_numbers<[1], [0], [0], [1], [0, 0, 1, 1], [], []>} : vector<16x2xf32>, vector<2x128xf32>, vector<16x128xf32> -> vector<16x128xf32>
    %79 = arith.mulf %57, %78 : vector<16x128xf32>
    %c896 = arith.constant 896 : index
    %c0_58 = arith.constant 0 : index
    %80 = vector.load %arg1[%c896, %c0_58] : memref<920x128xf32, #tpu.memory_space<vmem>>, vector<1x128xf32>
    %81 = vector.broadcast %80 : vector<1x128xf32> to vector<16x128xf32>
    %82 = arith.mulf %79, %81 : vector<16x128xf32>
    %c904 = arith.constant 904 : index
    %c0_59 = arith.constant 0 : index
    %83 = vector.load %arg1[%c904, %c0_59] : memref<920x128xf32, #tpu.memory_space<vmem>>, vector<1x128xf32>
    %84 = vector.broadcast %83 : vector<1x128xf32> to vector<16x128xf32>
    %85 = arith.addf %82, %84 : vector<16x128xf32>
    %cst_60 = arith.constant 0.000000e+00 : f32
    %86 = vector.broadcast %cst_60 : f32 to vector<16x128xf32>
    %87 = arith.maximumf %85, %86 : vector<16x128xf32>
    %c240 = arith.constant 240 : index
    %c0_61 = arith.constant 0 : index
    %88 = vector.load %arg1[%c240, %c0_61] : memref<920x128xf32, #tpu.memory_space<vmem>>, vector<128x40xf32>
    %cst_62 = arith.constant dense<0.000000e+00> : vector<16x40xf32>
    %89 = tpu.matmul %87, %88, %cst_62 {dimension_numbers = #tpu.dot_dimension_numbers<[1], [0], [0], [1], [0, 0, 1, 1], [], []>} : vector<16x128xf32>, vector<128x40xf32>, vector<16x40xf32> -> vector<16x40xf32>
    %c784 = arith.constant 784 : index
    %c0_63 = arith.constant 0 : index
    %90 = vector.load %arg1[%c784, %c0_63] : memref<920x128xf32, #tpu.memory_space<vmem>>, vector<16x40xf32>
    %91 = arith.mulf %89, %90 : vector<16x40xf32>
    %c776_64 = arith.constant 776 : index
    %c0_65 = arith.constant 0 : index
    %92 = vector.load %arg1[%c776_64, %c0_65] : memref<920x128xf32, #tpu.memory_space<vmem>>, vector<2x16xf32>
    %cst_66 = arith.constant dense<0.000000e+00> : vector<2x40xf32>
    %93 = tpu.matmul %92, %91, %cst_66 {dimension_numbers = #tpu.dot_dimension_numbers<[1], [0], [0], [1], [0, 0, 1, 1], [], []>} : vector<2x16xf32>, vector<16x40xf32>, vector<2x40xf32> -> vector<2x40xf32>
    %c800 = arith.constant 800 : index
    %c0_67 = arith.constant 0 : index
    %94 = vector.load %arg1[%c800, %c0_67] : memref<920x128xf32, #tpu.memory_space<vmem>>, vector<40x5xf32>
    %cst_68 = arith.constant dense<0.000000e+00> : vector<2x5xf32>
    %95 = tpu.matmul %93, %94, %cst_68 {dimension_numbers = #tpu.dot_dimension_numbers<[1], [0], [0], [1], [0, 0, 1, 1], [], []>} : vector<2x40xf32>, vector<40x5xf32>, vector<2x5xf32> -> vector<2x5xf32>
    %c912 = arith.constant 912 : index
    %c0_69 = arith.constant 0 : index
    %96 = vector.load %arg1[%c912, %c0_69] : memref<920x128xf32, #tpu.memory_space<vmem>>, vector<1x5xf32>
    %97 = vector.broadcast %96 : vector<1x5xf32> to vector<2x5xf32>
    %98 = arith.addf %95, %97 : vector<2x5xf32>
    %cst_70 = arith.constant dense<0xFF800000> : vector<2xf32>
    %99 = vector.multi_reduction <maximumf>, %98, %cst_70 [1] : vector<2x5xf32> to vector<2xf32>
    %100 = vector.shape_cast %99 : vector<2xf32> to vector<2x1xf32>
    %101 = vector.broadcast %100 : vector<2x1xf32> to vector<2x5xf32>
    %102 = arith.subf %98, %101 : vector<2x5xf32>
    %103 = math.exp %102 : vector<2x5xf32>
    %cst_71 = arith.constant dense<0.000000e+00> : vector<2xf32>
    %104 = vector.multi_reduction <add>, %103, %cst_71 [1] : vector<2x5xf32> to vector<2xf32>
    %105 = vector.shape_cast %104 : vector<2xf32> to vector<2x1xf32>
    %106 = vector.broadcast %105 : vector<2x1xf32> to vector<2x5xf32>
    %107 = arith.divf %103, %106 : vector<2x5xf32>
    %c0_72 = arith.constant 0 : index
    %c0_73 = arith.constant 0 : index
    %108 = vector.load %arg2[%c0_72, %c0_73] : memref<2x5xf32, #tpu.memory_space<vmem>>, vector<2x5xf32>
    tpu.vector_store %arg2[%c0_72, %c0_73], %107 {strides = array<i32>} : memref<2x5xf32, #tpu.memory_space<vmem>>, vector<2x5xf32>,
    return
  }
}

</mosaic_0001>

<llo_original>
// kernel: se_forward.1
$region0: #{se_forward.1}
  #allocation0 [shape = 'u32[]', space=smem, size = 0x4, offset = 0x4, fixed_abs, tag = 'smem constant byte address 0x4 - core index']
  #allocation1 [shape = 'u32[144,128]{1,0:T(1,128)}', space=vmem, size = 0x12000, scoped, tag = 'internal scratch']
  %s0 = inlined_call_operand.vmem [shape: f32[22,11], index: 0, kind: input, shape index: {}]
  %s1 = inlined_call_operand.hbm [shape: f32[920,128], index: 1, kind: input, shape index: {}]
  %s2 = inlined_call_operand.hbm [shape: f32[2,5], index: 2, kind: output, shape index: {}]
  %s3 = sld [smem:[#allocation0]]
  $region22: #{se_forward.1} parent=0
    _
  %s5 = ssub.s32 1, %s3
  %s6 = scalar_select 0, %s5, %s3
  $region1: #{se_forward.1} parent=0
    #allocation2 [shape = 'u8[471040]{0}', space=vmem, size = 0x73000, scoped, tag = 'input window, operand 1, single buffered']
    #allocation3 [shape = 's32[1]{0}', space=sflag, size = 0x4, scoped, tag = 'scoped memory for se_forward.1']
    #allocation4 [shape = 's32[1]{0}', space=sflag, size = 0x4, scoped, tag = 'scoped memory for se_forward.1']
    #allocation5 [shape = 'u8[1024]{0}', space=vmem, size = 0x400, scoped, tag = 'output window, operand 0, single buffered']
    %7 = vsyncpa [#allocation3], 0
    %8 = vsyncpa [#allocation4], 0
    // Predicated region
    $region2: #{se_forward.1} parent=1 // pred_check
      _
    $region3: #{se_forward.1} parent=1 // pred_check_branch
      %10 = sbr.rel (0) target = $region5
    $region4: #{se_forward.1} parent=1 // pred_region
      _
    $region5: #{se_forward.1} parent=1 // pred_fallthru
      _
    // Predicated region
    $region6: #{se_forward.1} parent=1 // pred_check
      _
    $region7: #{se_forward.1} parent=1 // pred_check_branch
      %12 = sbr.rel (0) target = $region9
    $region8: #{se_forward.1} parent=1 // pred_region
      %s14 = ssub.s32 14720, 14720
      %15 = vsyncadd [#allocation3], %s14
      %s16 = sshll.u32 [#allocation2], 4
      %s17 = int_to_ptr.vmem [resolvable:$true] %s16
      %22 = dma.hbm_to_vmem [thread:$0]  %s1, 14720, %s17, [#allocation3], 128, 128, 8
    $region9: #{se_forward.1} parent=1 // pred_fallthru
      _
    // Predicated region
    $region10: #{se_forward.1} parent=1 // pred_check
      _
    $region11: #{se_forward.1} parent=1 // pred_check_branch
      %24 = sbr.rel (0) target = $region13
    $region12: #{se_forward.1} parent=1 // pred_region
      %25 = dma.done [#allocation3], 14720
    $region13: #{se_forward.1} parent=1 // pred_fallthru
      _
    %v26 = vld [vmem:[%s0] sm:$0xff]
    %v27 = vld [vmem:[%s0 + $0x8] sm:$0xff]
    %v28 = vld [vmem:[%s0 + $0x10] sm:$0x3f]
    %v29 = vld [vmem:[#allocation2 + $0x240] sm:$0xff]
    %v30 = vld [vmem:[#allocation2 + $0x248] sm:$0xff]
    %v31 = vld [vmem:[#allocation2 + $0x250] sm:$0xf]
    %v32 = vld [vmem:[#allocation2 + $0x2a0] sm:$0xff]
    %v33 = vld [vmem:[#allocation2 + $0x2a8] sm:$0x7]
    %vm34 = vcmask 179200
    %v36 = vsel %vm34, %v29, 0
    %v39 = vsel %vm34, %v30, 0
    %v42 = vsel %vm34, %v31, 0
    %vm44 = vcmask 1045504
    %v46 = vsel %vm44, %v28, 0
    %48 = vmatprep.subr.mxu0 0.0
    %49 = vmatpush1.msra.mxu0 %v26
    %50 = vmatprep.subr.mxu0 0.0
    %51 = vmatpush1.msra.mxu0 %v27
    %52 = vmatprep.subr.mxu0 0.0
    %53 = vmatpush1.msra.mxu0 %v46
    %54 = vmatprep.subr.mxu0 0.0
    %55 = vmatpush1.msra.mxu0 0.0
    %56 = vmatprep.subr.mxu0 0.0
    %57 = vmatpush1.msra.mxu0 0.0
    %58 = vmatprep.subr.mxu0 0.0
    %59 = vmatpush1.msra.mxu0 0.0
    %60 = vmatprep.subr.mxu0 0.0
    %61 = vmatpush1.msra.mxu0 0.0
    %62 = vmatprep.subr.mxu0 0.0
    %63 = vmatpush1.msra.mxu0 0.0
    %64 = vmatprep.subr.mxu0 0.0
    %65 = vmatpush1.msra.mxu0 0.0
    %66 = vmatprep.subr.mxu0 0.0
    %67 = vmatpush1.msra.mxu0 0.0
    %68 = vmatprep.subr.mxu0 0.0
    %69 = vmatpush1.msra.mxu0 0.0
    %70 = vmatprep.subr.mxu0 0.0
    %71 = vmatpush1.msra.mxu0 0.0
    %72 = vmatprep.subr.mxu0 0.0
    %73 = vmatpush1.msra.mxu0 0.0
    %74 = vmatprep.subr.mxu0 0.0
    %75 = vmatpush1.msra.mxu0 0.0
    %76 = vmatprep.subr.mxu0 0.0
    %77 = vmatpush1.msra.mxu0 0.0
    %78 = vmatprep.subr.mxu0 0.0
    %79 = vmatpush1.msra.mxu0 0.0
    %80 = vmatprep.subr.mxu0 0.0
    %81 = vmatpush1.msra.mxu0 0.0
    %82 = vmatprep.subr.mxu0 0.0
    %83 = vmatpush1.msra.mxu0 0.0
    %84 = vmatprep.subr.mxu0 0.0
    %85 = vmatpush1.msra.mxu0 0.0
    %86 = vmatprep.subr.mxu0 0.0
    %87 = vmatpush1.msra.mxu0 0.0
    %88 = vmatprep.subr.mxu0 0.0
    %89 = vmatpush1.msra.mxu0 0.0
    %90 = vmatprep.subr.mxu0 0.0
    %91 = vmatpush1.msra.mxu0 0.0
    %92 = vmatprep.subr.mxu0 0.0
    %93 = vmatpush1.msra.mxu0 0.0
    %94 = vmatprep.subr.mxu0 0.0
    %95 = vmatpush1.msra.mxu0 0.0
    %96 = vmatprep.subr.mxu0 0.0
    %97 = vmatpush1.msra.mxu0 0.0
    %98 = vmatprep.subr.mxu0 0.0
    %99 = vmatpush1.msra.mxu0 0.0
    %100 = vmatprep.subr.mxu0 0.0
    %101 = vmatpush1.msra.mxu0 0.0
    %102 = vmatprep.subr.mxu0 0.0
    %103 = vmatpush1.msra.mxu0 0.0
    %104 = vmatprep.subr.mxu0 0.0
    %105 = vmatpush1.msra.mxu0 0.0
    %106 = vmatprep.subr.mxu0 0.0
    %107 = vmatpush1.msra.mxu0 0.0
    %108 = vmatprep.subr.mxu0 0.0
    %109 = vmatpush1.msra.mxu0 0.0
    %110 = vmatprep.subr.mxu0 0.0
    %111 = vmatpush1.msra.mxu0 0.0
    %112 = vmatprep.mubr.f32.mxu0 0.0
    %113 = vmatmul.mubr.f32.gmra.mrb[0].mxu0 %v36
    %v114 = vpop.f32.mrb[0].mxu0
    %v115 = vadd.f32 0.0, %v114
    %v116 = vpop.f32.mrb[0].mxu0
    %117 = vmatprep.mubr.f32.mxu0 0.0
    %118 = vmatmul.mubr.f32.gmra.mrb[0].mxu0 %v39
    %v119 = vpop.f32.mrb[0].mxu0
    %v120 = vadd.f32 0.0, %v119
    %v121 = vpop.f32.mrb[0].mxu0
    %122 = vmatprep.mubr.f32.mxu0 0.0
    %123 = vmatmul.mubr.f32.gmra.mrb[0].mxu0 %v42
    %v124 = vpop.f32.mrb[0].mxu0
    %v125 = vadd.f32 0.0, %v124
    %v126 = vpop.f32.mrb[0].mxu0
    %127 = vdwg.mxu0
    %v128 = vld [vmem:[#allocation2 + $0x258] sm:$0xff]
    %v129 = vld [vmem:[#allocation2 + $0x260] sm:$0xff]
    %v130 = vld [vmem:[#allocation2 + $0x268] sm:$0xf]
    %v131 = vld [vmem:[#allocation2 + $0x2b0] sm:$0xff]
    %v132 = vld [vmem:[#allocation2 + $0x2b8] sm:$0x7]
    %v134 = vsel %vm34, %v128, 0
    %v137 = vsel %vm34, %v129, 0
    %v140 = vsel %vm34, %v130, 0
    %142 = vmatprep.subr.mxu0 0.0
    %143 = vmatpush1.msra.mxu0 %v26
    %144 = vmatprep.subr.mxu0 0.0
    %145 = vmatpush1.msra.mxu0 %v27
    %146 = vmatprep.subr.mxu0 0.0
    %147 = vmatpush1.msra.mxu0 %v46
    %148 = vmatprep.subr.mxu0 0.0
    %149 = vmatpush1.msra.mxu0 0.0
    %150 = vmatprep.subr.mxu0 0.0
    %151 = vmatpush1.msra.mxu0 0.0
    %152 = vmatprep.subr.mxu0 0.0
    %153 = vmatpush1.msra.mxu0 0.0
    %154 = vmatprep.subr.mxu0 0.0
    %155 = vmatpush1.msra.mxu0 0.0
    %156 = vmatprep.subr.mxu0 0.0
    %157 = vmatpush1.msra.mxu0 0.0
    %158 = vmatprep.subr.mxu0 0.0
    %159 = vmatpush1.msra.mxu0 0.0
    %160 = vmatprep.subr.mxu0 0.0
    %161 = vmatpush1.msra.mxu0 0.0
    %162 = vmatprep.subr.mxu0 0.0
    %163 = vmatpush1.msra.mxu0 0.0
    %164 = vmatprep.subr.mxu0 0.0
    %165 = vmatpush1.msra.mxu0 0.0
    %166 = vmatprep.subr.mxu0 0.0
    %167 = vmatpush1.msra.mxu0 0.0
    %168 = vmatprep.subr.mxu0 0.0
    %169 = vmatpush1.msra.mxu0 0.0
    %170 = vmatprep.subr.mxu0 0.0
    %171 = vmatpush1.msra.mxu0 0.0
    %172 = vmatprep.subr.mxu0 0.0
    %173 = vmatpush1.msra.mxu0 0.0
    %174 = vmatprep.subr.mxu0 0.0
    %175 = vmatpush1.msra.mxu0 0.0
    %176 = vmatprep.subr.mxu0 0.0
    %177 = vmatpush1.msra.mxu0 0.0
    %178 = vmatprep.subr.mxu0 0.0
    %179 = vmatpush1.msra.mxu0 0.0
    %180 = vmatprep.subr.mxu0 0.0
    %181 = vmatpush1.msra.mxu0 0.0
    %182 = vmatprep.subr.mxu0 0.0
    %183 = vmatpush1.msra.mxu0 0.0
    %184 = vmatprep.subr.mxu0 0.0
    %185 = vmatpush1.msra.mxu0 0.0
    %186 = vmatprep.subr.mxu0 0.0
    %187 = vmatpush1.msra.mxu0 0.0
    %188 = vmatprep.subr.mxu0 0.0
    %189 = vmatpush1.msra.mxu0 0.0
    %190 = vmatprep.subr.mxu0 0.0
    %191 = vmatpush1.msra.mxu0 0.0
    %192 = vmatprep.subr.mxu0 0.0
    %193 = vmatpush1.msra.mxu0 0.0
    %194 = vmatprep.subr.mxu0 0.0
    %195 = vmatpush1.msra.mxu0 0.0
    %196 = vmatprep.subr.mxu0 0.0
    %197 = vmatpush1.msra.mxu0 0.0
    %198 = vmatprep.subr.mxu0 0.0
    %199 = vmatpush1.msra.mxu0 0.0
    %200 = vmatprep.subr.mxu0 0.0
    %201 = vmatpush1.msra.mxu0 0.0
    %202 = vmatprep.subr.mxu0 0.0
    %203 = vmatpush1.msra.mxu0 0.0
    %204 = vmatprep.subr.mxu0 0.0
    %205 = vmatpush1.msra.mxu0 0.0
    %206 = vmatprep.mubr.f32.mxu0 0.0
    %207 = vmatmul.mubr.f32.gmra.mrb[0].mxu0 %v134
    %v208 = vpop.f32.mrb[0].mxu0
    %v209 = vadd.f32 0.0, %v208
    %v210 = vpop.f32.mrb[0].mxu0
    %211 = vmatprep.mubr.f32.mxu0 0.0
    %212 = vmatmul.mubr.f32.gmra.mrb[0].mxu0 %v137
    %v213 = vpop.f32.mrb[0].mxu0
    %v214 = vadd.f32 0.0, %v213
    %v215 = vpop.f32.mrb[0].mxu0
    %216 = vmatprep.mubr.f32.mxu0 0.0
    %217 = vmatmul.mubr.f32.gmra.mrb[0].mxu0 %v140
    %v218 = vpop.f32.mrb[0].mxu0
    %v219 = vadd.f32 0.0, %v218
    %v220 = vpop.f32.mrb[0].mxu0
    %221 = vdwg.mxu0
    %vm222 = vcmask 89088
    %v224 = vsel %vm222, %v209, 0
    %v227 = vsel %vm222, %v214, 0
    %v230 = vsel %vm222, %v219, 0
    %vm232 = vcmask 1042432
    %v234 = vsel %vm232, %v132, 0
    %236 = vmatprep.subr.mxu0 0.0
    %237 = vmatpush1.msra.mxu0 %v131
    %238 = vmatprep.subr.mxu0 0.0
    %239 = vmatpush1.msra.mxu0 %v234
    %240 = vmatprep.subr.mxu0 0.0
    %241 = vmatpush1.msra.mxu0 0.0
    %242 = vmatprep.subr.mxu0 0.0
    %243 = vmatpush1.msra.mxu0 0.0
    %244 = vmatprep.subr.mxu0 0.0
    %245 = vmatpush1.msra.mxu0 0.0
    %246 = vmatprep.subr.mxu0 0.0
    %247 = vmatpush1.msra.mxu0 0.0
    %248 = vmatprep.subr.mxu0 0.0
    %249 = vmatpush1.msra.mxu0 0.0
    %250 = vmatprep.subr.mxu0 0.0
    %251 = vmatpush1.msra.mxu0 0.0
    %252 = vmatprep.subr.mxu0 0.0
    %253 = vmatpush1.msra.mxu0 0.0
    %254 = vmatprep.subr.mxu0 0.0
    %255 = vmatpush1.msra.mxu0 0.0
    %256 = vmatprep.subr.mxu0 0.0
    %257 = vmatpush1.msra.mxu0 0.0
    %258 = vmatprep.subr.mxu0 0.0
    %259 = vmatpush1.msra.mxu0 0.0
    %260 = vmatprep.subr.mxu0 0.0
    %261 = vmatpush1.msra.mxu0 0.0
    %262 = vmatprep.subr.mxu0 0.0
    %263 = vmatpush1.msra.mxu0 0.0
    %264 = vmatprep.subr.mxu0 0.0
    %265 = vmatpush1.msra.mxu0 0.0
    %266 = vmatprep.subr.mxu0 0.0
    %267 = vmatpush1.msra.mxu0 0.0
    %268 = vmatprep.subr.mxu0 0.0
    %269 = vmatpush1.msra.mxu0 0.0
    %270 = vmatprep.subr.mxu0 0.0
    %271 = vmatpush1.msra.mxu0 0.0
    %272 = vmatprep.subr.mxu0 0.0
    %273 = vmatpush1.msra.mxu0 0.0
    %274 = vmatprep.subr.mxu0 0.0
    %275 = vmatpush1.msra.mxu0 0.0
    %276 = vmatprep.subr.mxu0 0.0
    %277 = vmatpush1.msra.mxu0 0.0
    %278 = vmatprep.subr.mxu0 0.0
    %279 = vmatpush1.msra.mxu0 0.0
    %280 = vmatprep.subr.mxu0 0.0
    %281 = vmatpush1.msra.mxu0 0.0
    %282 = vmatprep.subr.mxu0 0.0
    %283 = vmatpush1.msra.mxu0 0.0
    %284 = vmatprep.subr.mxu0 0.0
    %285 = vmatpush1.msra.mxu0 0.0
    %286 = vmatprep.subr.mxu0 0.0
    %287 = vmatpush1.msra.mxu0 0.0
    %288 = vmatprep.subr.mxu0 0.0
    %289 = vmatpush1.msra.mxu0 0.0
    %290 = vmatprep.subr.mxu0 0.0
    %291 = vmatpush1.msra.mxu0 0.0
    %292 = vmatprep.subr.mxu0 0.0
    %293 = vmatpush1.msra.mxu0 0.0
    %294 = vmatprep.subr.mxu0 0.0
    %295 = vmatpush1.msra.mxu0 0.0
    %296 = vmatprep.subr.mxu0 0.0
    %297 = vmatpush1.msra.mxu0 0.0
    %298 = vmatprep.subr.mxu0 0.0
    %299 = vmatpush1.msra.mxu0 0.0
    %300 = vmatprep.mubr.f32.mxu0 0.0
    %301 = vmatmul.mubr.f32.gmra.mrb[0].mxu0 %v224
    %v302 = vpop.f32.mrb[0].mxu0
    %v303 = vadd.f32 0.0, %v302
    %v304 = vpop.f32.mrb[0].mxu0
    %305 = vmatprep.mubr.f32.mxu0 0.0
    %306 = vmatmul.mubr.f32.gmra.mrb[0].mxu0 %v227
    %v307 = vpop.f32.mrb[0].mxu0
    %v308 = vadd.f32 0.0, %v307
    %v309 = vpop.f32.mrb[0].mxu0
    %310 = vmatprep.mubr.f32.mxu0 0.0
    %311 = vmatmul.mubr.f32.gmra.mrb[0].mxu0 %v230
    %v312 = vpop.f32.mrb[0].mxu0
    %v313 = vadd.f32 0.0, %v312
    %v314 = vpop.f32.mrb[0].mxu0
    %315 = vdwg.mxu0
    %v317 = vsel %vm222, %v115, 0
    %v320 = vsel %vm222, %v120, 0
    %v323 = vsel %vm222, %v125, 0
    %v326 = vsel %vm232, %v33, 0
    %328 = vmatprep.subr.mxu0 0.0
    %329 = vmatpush1.msra.mxu0 %v32
    %330 = vmatprep.subr.mxu0 0.0
    %331 = vmatpush1.msra.mxu0 %v326
    %332 = vmatprep.subr.mxu0 0.0
    %333 = vmatpush1.msra.mxu0 0.0
    %334 = vmatprep.subr.mxu0 0.0
    %335 = vmatpush1.msra.mxu0 0.0
    %336 = vmatprep.subr.mxu0 0.0
    %337 = vmatpush1.msra.mxu0 0.0
    %338 = vmatprep.subr.mxu0 0.0
    %339 = vmatpush1.msra.mxu0 0.0
    %340 = vmatprep.subr.mxu0 0.0
    %341 = vmatpush1.msra.mxu0 0.0
    %342 = vmatprep.subr.mxu0 0.0
    %343 = vmatpush1.msra.mxu0 0.0
    %344 = vmatprep.subr.mxu0 0.0
    %345 = vmatpush1.msra.mxu0 0.0
    %346 = vmatprep.subr.mxu0 0.0
    %347 = vmatpush1.msra.mxu0 0.0
    %348 = vmatprep.subr.mxu0 0.0
    %349 = vmatpush1.msra.mxu0 0.0
    %350 = vmatprep.subr.mxu0 0.0
    %351 = vmatpush1.msra.mxu0 0.0
    %352 = vmatprep.subr.mxu0 0.0
    %353 = vmatpush1.msra.mxu0 0.0
    %354 = vmatprep.subr.mxu0 0.0
    %355 = vmatpush1.msra.mxu0 0.0
    %356 = vmatprep.subr.mxu0 0.0
    %357 = vmatpush1.msra.mxu0 0.0
    %358 = vmatprep.subr.mxu0 0.0
    %359 = vmatpush1.msra.mxu0 0.0
    %360 = vmatprep.subr.mxu0 0.0
    %361 = vmatpush1.msra.mxu0 0.0
    %362 = vmatprep.subr.mxu0 0.0
    %363 = vmatpush1.msra.mxu0 0.0
    %364 = vmatprep.subr.mxu0 0.0
    %365 = vmatpush1.msra.mxu0 0.0
    %366 = vmatprep.subr.mxu0 0.0
    %367 = vmatpush1.msra.mxu0 0.0
    %368 = vmatprep.subr.mxu0 0.0
    %369 = vmatpush1.msra.mxu0 0.0
    %370 = vmatprep.subr.mxu0 0.0
    %371 = vmatpush1.msra.mxu0 0.0
    %372 = vmatprep.subr.mxu0 0.0
    %373 = vmatpush1.msra.mxu0 0.0
    %374 = vmatprep.subr.mxu0 0.0
    %375 = vmatpush1.msra.mxu0 0.0
    %376 = vmatprep.subr.mxu0 0.0
    %377 = vmatpush1.msra.mxu0 0.0
    %378 = vmatprep.subr.mxu0 0.0
    %379 = vmatpush1.msra.mxu0 0.0
    %380 = vmatprep.subr.mxu0 0.0
    %381 = vmatpush1.msra.mxu0 0.0
    %382 = vmatprep.subr.mxu0 0.0
    %383 = vmatpush1.msra.mxu0 0.0
    %384 = vmatprep.subr.mxu0 0.0
    %385 = vmatpush1.msra.mxu0 0.0
    %386 = vmatprep.subr.mxu0 0.0
    %387 = vmatpush1.msra.mxu0 0.0
    %388 = vmatprep.subr.mxu0 0.0
    %389 = vmatpush1.msra.mxu0 0.0
    %390 = vmatprep.subr.mxu0 0.0
    %391 = vmatpush1.msra.mxu0 0.0
    %392 = vmatprep.mubr.f32.mxu0 0.0
    %393 = vmatmul.mubr.f32.gmra.mrb[0].mxu0 %v317
    %v394 = vpop.f32.mrb[0].mxu0
    %v395 = vadd.f32 %v303, %v394
    %v396 = vpop.f32.mrb[0].mxu0
    %397 = vmatprep.mubr.f32.mxu0 0.0
    %398 = vmatmul.mubr.f32.gmra.mrb[0].mxu0 %v320
    %v399 = vpop.f32.mrb[0].mxu0
    %v400 = vadd.f32 %v308, %v399
    %v401 = vpop.f32.mrb[0].mxu0
    %402 = vmatprep.mubr.f32.mxu0 0.0
    %403 = vmatmul.mubr.f32.gmra.mrb[0].mxu0 %v323
    %v404 = vpop.f32.mrb[0].mxu0
    %v405 = vadd.f32 %v313, %v404
    %v406 = vpop.f32.mrb[0].mxu0
    %407 = vdwg.mxu0
    %v408 = vld [vmem:[#allocation2 + $0x370] sm:$0x1]
    %v409 = vlaneseq
    %v410 = vshrl.u32 %v409, 7
    %v411 = vsub.s32 0, %v410
    %v412 = vrot.slane %v408, %v411
    %v413 = vadd.f32 %v395, %v412
    %v414 = vadd.f32 %v400, %v412
    %v415 = vadd.f32 %v405, %v412
    %v416 = vmax.f32 %v413, 0.0
    %v417 = vmax.f32 %v414, 0.0
    %v418 = vmax.f32 %v415, 0.0
    %v419 = vld [vmem:[#allocation2 + $0x300] sm:$0x3]
    %vm420 = vcmask 162816
    %v422 = vsel %vm420, %v419, 0
    %vm424 = vcmask 1043456
    %v426 = vsel %vm424, %v418, 0
    %428 = vmatprep.subr.mxu0 0.0
    %429 = vmatpush1.msra.mxu0 %v416
    %430 = vmatprep.subr.mxu0 0.0
    %431 = vmatpush1.msra.mxu0 %v417
    %432 = vmatprep.subr.mxu0 0.0
    %433 = vmatpush1.msra.mxu0 %v426
    %434 = vmatprep.subr.mxu0 0.0
    %435 = vmatpush1.msra.mxu0 0.0
    %436 = vmatprep.subr.mxu0 0.0
    %437 = vmatpush1.msra.mxu0 0.0
    %438 = vmatprep.subr.mxu0 0.0
    %439 = vmatpush1.msra.mxu0 0.0
    %440 = vmatprep.subr.mxu0 0.0
    %441 = vmatpush1.msra.mxu0 0.0
    %442 = vmatprep.subr.mxu0 0.0
    %443 = vmatpush1.msra.mxu0 0.0
    %444 = vmatprep.subr.mxu0 0.0
    %445 = vmatpush1.msra.mxu0 0.0
    %446 = vmatprep.subr.mxu0 0.0
    %447 = vmatpush1.msra.mxu0 0.0
    %448 = vmatprep.subr.mxu0 0.0
    %449 = vmatpush1.msra.mxu0 0.0
    %450 = vmatprep.subr.mxu0 0.0
    %451 = vmatpush1.msra.mxu0 0.0
    %452 = vmatprep.subr.mxu0 0.0
    %453 = vmatpush1.msra.mxu0 0.0
    %454 = vmatprep.subr.mxu0 0.0
    %455 = vmatpush1.msra.mxu0 0.0
    %456 = vmatprep.subr.mxu0 0.0
    %457 = vmatpush1.msra.mxu0 0.0
    %458 = vmatprep.subr.mxu0 0.0
    %459 = vmatpush1.msra.mxu0 0.0
    %460 = vmatprep.subr.mxu0 0.0
    %461 = vmatpush1.msra.mxu0 0.0
    %462 = vmatprep.subr.mxu0 0.0
    %463 = vmatpush1.msra.mxu0 0.0
    %464 = vmatprep.subr.mxu0 0.0
    %465 = vmatpush1.msra.mxu0 0.0
    %466 = vmatprep.subr.mxu0 0.0
    %467 = vmatpush1.msra.mxu0 0.0
    %468 = vmatprep.subr.mxu0 0.0
    %469 = vmatpush1.msra.mxu0 0.0
    %470 = vmatprep.subr.mxu0 0.0
    %471 = vmatpush1.msra.mxu0 0.0
    %472 = vmatprep.subr.mxu0 0.0
    %473 = vmatpush1.msra.mxu0 0.0
    %474 = vmatprep.subr.mxu0 0.0
    %475 = vmatpush1.msra.mxu0 0.0
    %476 = vmatprep.subr.mxu0 0.0
    %477 = vmatpush1.msra.mxu0 0.0
    %478 = vmatprep.subr.mxu0 0.0
    %479 = vmatpush1.msra.mxu0 0.0
    %480 = vmatprep.subr.mxu0 0.0
    %481 = vmatpush1.msra.mxu0 0.0
    %482 = vmatprep.subr.mxu0 0.0
    %483 = vmatpush1.msra.mxu0 0.0
    %484 = vmatprep.subr.mxu0 0.0
    %485 = vmatpush1.msra.mxu0 0.0
    %486 = vmatprep.subr.mxu0 0.0
    %487 = vmatpush1.msra.mxu0 0.0
    %488 = vmatprep.subr.mxu0 0.0
    %489 = vmatpush1.msra.mxu0 0.0
    %490 = vmatprep.subr.mxu0 0.0
    %491 = vmatpush1.msra.mxu0 0.0
    %492 = vmatprep.mubr.f32.mxu0 0.0
    %493 = vmatmul.mubr.f32.gmra.mrb[0].mxu0 %v422
    %v494 = vpop.f32.mrb[0].mxu0
    %v495 = vadd.f32 0.0, %v494
    %v496 = vpop.f32.mrb[0].mxu0
    %497 = vdwg.mxu0
    %v498 = vld [vmem:[#allocation2 + $0x1f0] sm:$0xff]
    %v499 = vld [vmem:[#allocation2 + $0x1f8] sm:$0xff]
    %v500 = vld [vmem:[#allocation2 + $0x200] sm:$0xff]
    %v501 = vld [vmem:[#allocation2 + $0x208] sm:$0xff]
    %v502 = vld [vmem:[#allocation2 + $0x210] sm:$0xff]
    %v503 = vld [vmem:[#allocation2 + $0x218] sm:$0xff]
    %v504 = vld [vmem:[#allocation2 + $0x220] sm:$0xff]
    %v505 = vld [vmem:[#allocation2 + $0x228] sm:$0xff]
    %v506 = vld [vmem:[#allocation2 + $0x230] sm:$0xff]
    %v507 = vld [vmem:[#allocation2 + $0x238] sm:$0xff]
    %vm508 = vcmask 654336
    %v510 = vsel %vm508, %v495, 0
    %512 = vmatprep.subr.mxu0 0.0
    %513 = vmatpush1.msra.mxu0 %v498
    %514 = vmatprep.subr.mxu0 0.0
    %515 = vmatpush1.msra.mxu0 %v499
    %516 = vmatprep.subr.mxu0 0.0
    %517 = vmatpush1.msra.mxu0 %v500
    %518 = vmatprep.subr.mxu0 0.0
    %519 = vmatpush1.msra.mxu0 %v501
    %520 = vmatprep.subr.mxu0 0.0
    %521 = vmatpush1.msra.mxu0 %v502
    %522 = vmatprep.subr.mxu0 0.0
    %523 = vmatpush1.msra.mxu0 %v503
    %524 = vmatprep.subr.mxu0 0.0
    %525 = vmatpush1.msra.mxu0 %v504
    %526 = vmatprep.subr.mxu0 0.0
    %527 = vmatpush1.msra.mxu0 %v505
    %528 = vmatprep.subr.mxu0 0.0
    %529 = vmatpush1.msra.mxu0 %v506
    %530 = vmatprep.subr.mxu0 0.0
    %531 = vmatpush1.msra.mxu0 %v507
    %532 = vmatprep.subr.mxu0 0.0
    %533 = vmatpush1.msra.mxu0 0.0
    %534 = vmatprep.subr.mxu0 0.0
    %535 = vmatpush1.msra.mxu0 0.0
    %536 = vmatprep.subr.mxu0 0.0
    %537 = vmatpush1.msra.mxu0 0.0
    %538 = vmatprep.subr.mxu0 0.0
    %539 = vmatpush1.msra.mxu0 0.0
    %540 = vmatprep.subr.mxu0 0.0
    %541 = vmatpush1.msra.mxu0 0.0
    %542 = vmatprep.subr.mxu0 0.0
    %543 = vmatpush1.msra.mxu0 0.0
    %544 = vmatprep.subr.mxu0 0.0
    %545 = vmatpush1.msra.mxu0 0.0
    %546 = vmatprep.subr.mxu0 0.0
    %547 = vmatpush1.msra.mxu0 0.0
    %548 = vmatprep.subr.mxu0 0.0
    %549 = vmatpush1.msra.mxu0 0.0
    %550 = vmatprep.subr.mxu0 0.0
    %551 = vmatpush1.msra.mxu0 0.0
    %552 = vmatprep.subr.mxu0 0.0
    %553 = vmatpush1.msra.mxu0 0.0
    %554 = vmatprep.subr.mxu0 0.0
    %555 = vmatpush1.msra.mxu0 0.0
    %556 = vmatprep.subr.mxu0 0.0
    %557 = vmatpush1.msra.mxu0 0.0
    %558 = vmatprep.subr.mxu0 0.0
    %559 = vmatpush1.msra.mxu0 0.0
    %560 = vmatprep.subr.mxu0 0.0
    %561 = vmatpush1.msra.mxu0 0.0
    %562 = vmatprep.subr.mxu0 0.0
    %563 = vmatpush1.msra.mxu0 0.0
    %564 = vmatprep.subr.mxu0 0.0
    %565 = vmatpush1.msra.mxu0 0.0
    %566 = vmatprep.subr.mxu0 0.0
    %567 = vmatpush1.msra.mxu0 0.0
    %568 = vmatprep.subr.mxu0 0.0
    %569 = vmatpush1.msra.mxu0 0.0
    %570 = vmatprep.subr.mxu0 0.0
    %571 = vmatpush1.msra.mxu0 0.0
    %572 = vmatprep.subr.mxu0 0.0
    %573 = vmatpush1.msra.mxu0 0.0
    %574 = vmatprep.subr.mxu0 0.0
    %575 = vmatpush1.msra.mxu0 0.0
    %576 = vmatprep.mubr.f32.mxu0 0.0
    %577 = vmatmul.mubr.f32.gmra.mrb[0].mxu0 %v510
    %v578 = vpop.f32.mrb[0].mxu0
    %v579 = vadd.f32 0.0, %v578
    %v580 = vpop.f32.mrb[0].mxu0
    %581 = vdwg.mxu0
    %v582 = vld [vmem:[#allocation2 + $0x348] sm:$0xff]
    %vm583 = vcmask 64512
    %v585 = vsel %vm583, %v579, 0
    %587 = vmatprep.subr.mxu0 0.0
    %588 = vmatpush1.msra.mxu0 %v582
    %589 = vmatprep.subr.mxu0 0.0
    %590 = vmatpush1.msra.mxu0 0.0
    %591 = vmatprep.subr.mxu0 0.0
    %592 = vmatpush1.msra.mxu0 0.0
    %593 = vmatprep.subr.mxu0 0.0
    %594 = vmatpush1.msra.mxu0 0.0
    %595 = vmatprep.subr.mxu0 0.0
    %596 = vmatpush1.msra.mxu0 0.0
    %597 = vmatprep.subr.mxu0 0.0
    %598 = vmatpush1.msra.mxu0 0.0
    %599 = vmatprep.subr.mxu0 0.0
    %600 = vmatpush1.msra.mxu0 0.0
    %601 = vmatprep.subr.mxu0 0.0
    %602 = vmatpush1.msra.mxu0 0.0
    %603 = vmatprep.subr.mxu0 0.0
    %604 = vmatpush1.msra.mxu0 0.0
    %605 = vmatprep.subr.mxu0 0.0
    %606 = vmatpush1.msra.mxu0 0.0
    %607 = vmatprep.subr.mxu0 0.0
    %608 = vmatpush1.msra.mxu0 0.0
    %609 = vmatprep.subr.mxu0 0.0
    %610 = vmatpush1.msra.mxu0 0.0
    %611 = vmatprep.subr.mxu0 0.0
    %612 = vmatpush1.msra.mxu0 0.0
    %613 = vmatprep.subr.mxu0 0.0
    %614 = vmatpush1.msra.mxu0 0.0
    %615 = vmatprep.subr.mxu0 0.0
    %616 = vmatpush1.msra.mxu0 0.0
    %617 = vmatprep.subr.mxu0 0.0
    %618 = vmatpush1.msra.mxu0 0.0
    %619 = vmatprep.subr.mxu0 0.0
    %620 = vmatpush1.msra.mxu0 0.0
    %621 = vmatprep.subr.mxu0 0.0
    %622 = vmatpush1.msra.mxu0 0.0
    %623 = vmatprep.subr.mxu0 0.0
    %624 = vmatpush1.msra.mxu0 0.0
    %625 = vmatprep.subr.mxu0 0.0
    %626 = vmatpush1.msra.mxu0 0.0
    %627 = vmatprep.subr.mxu0 0.0
    %628 = vmatpush1.msra.mxu0 0.0
    %629 = vmatprep.subr.mxu0 0.0
    %630 = vmatpush1.msra.mxu0 0.0
    %631 = vmatprep.subr.mxu0 0.0
    %632 = vmatpush1.msra.mxu0 0.0
    %633 = vmatprep.subr.mxu0 0.0
    %634 = vmatpush1.msra.mxu0 0.0
    %635 = vmatprep.subr.mxu0 0.0
    %636 = vmatpush1.msra.mxu0 0.0
    %637 = vmatprep.subr.mxu0 0.0
    %638 = vmatpush1.msra.mxu0 0.0
    %639 = vmatprep.subr.mxu0 0.0
    %640 = vmatpush1.msra.mxu0 0.0
    %641 = vmatprep.subr.mxu0 0.0
    %642 = vmatpush1.msra.mxu0 0.0
    %643 = vmatprep.subr.mxu0 0.0
    %644 = vmatpush1.msra.mxu0 0.0
    %645 = vmatprep.subr.mxu0 0.0
    %646 = vmatpush1.msra.mxu0 0.0
    %647 = vmatprep.subr.mxu0 0.0
    %648 = vmatpush1.msra.mxu0 0.0
    %649 = vmatprep.subr.mxu0 0.0
    %650 = vmatpush1.msra.mxu0 0.0
    %651 = vmatprep.mubr.f32.mxu0 0.0
    %652 = vmatmul.mubr.f32.gmra.mrb[0].mxu0 %v585
    %v653 = vpop.f32.mrb[0].mxu0
    %v654 = vadd.f32 0.0, %v653
    %v655 = vpop.f32.mrb[0].mxu0
    %656 = vdwg.mxu0
    %v657 = vmax.f32 %v654, 0.0
    %v658 = vld [vmem:[#allocation2 + $0x350] sm:$0x3]
    %vm659 = vcmask 15360
    %v661 = vsel %vm659, %v657, 0
    %vm663 = vcmask 1041408
    %v665 = vsel %vm663, %v658, 0
    %667 = vmatprep.subr.mxu0 0.0
    %668 = vmatpush1.msra.mxu0 %v665
    %669 = vmatprep.subr.mxu0 0.0
    %670 = vmatpush1.msra.mxu0 0.0
    %671 = vmatprep.subr.mxu0 0.0
    %672 = vmatpush1.msra.mxu0 0.0
    %673 = vmatprep.subr.mxu0 0.0
    %674 = vmatpush1.msra.mxu0 0.0
    %675 = vmatprep.subr.mxu0 0.0
    %676 = vmatpush1.msra.mxu0 0.0
    %677 = vmatprep.subr.mxu0 0.0
    %678 = vmatpush1.msra.mxu0 0.0
    %679 = vmatprep.subr.mxu0 0.0
    %680 = vmatpush1.msra.mxu0 0.0
    %681 = vmatprep.subr.mxu0 0.0
    %682 = vmatpush1.msra.mxu0 0.0
    %683 = vmatprep.subr.mxu0 0.0
    %684 = vmatpush1.msra.mxu0 0.0
    %685 = vmatprep.subr.mxu0 0.0
    %686 = vmatpush1.msra.mxu0 0.0
    %687 = vmatprep.subr.mxu0 0.0
    %688 = vmatpush1.msra.mxu0 0.0
    %689 = vmatprep.subr.mxu0 0.0
    %690 = vmatpush1.msra.mxu0 0.0
    %691 = vmatprep.subr.mxu0 0.0
    %692 = vmatpush1.msra.mxu0 0.0
    %693 = vmatprep.subr.mxu0 0.0
    %694 = vmatpush1.msra.mxu0 0.0
    %695 = vmatprep.subr.mxu0 0.0
    %696 = vmatpush1.msra.mxu0 0.0
    %697 = vmatprep.subr.mxu0 0.0
    %698 = vmatpush1.msra.mxu0 0.0
    %699 = vmatprep.subr.mxu0 0.0
    %700 = vmatpush1.msra.mxu0 0.0
    %701 = vmatprep.subr.mxu0 0.0
    %702 = vmatpush1.msra.mxu0 0.0
    %703 = vmatprep.subr.mxu0 0.0
    %704 = vmatpush1.msra.mxu0 0.0
    %705 = vmatprep.subr.mxu0 0.0
    %706 = vmatpush1.msra.mxu0 0.0
    %707 = vmatprep.subr.mxu0 0.0
    %708 = vmatpush1.msra.mxu0 0.0
    %709 = vmatprep.subr.mxu0 0.0
    %710 = vmatpush1.msra.mxu0 0.0
    %711 = vmatprep.subr.mxu0 0.0
    %712 = vmatpush1.msra.mxu0 0.0
    %713 = vmatprep.subr.mxu0 0.0
    %714 = vmatpush1.msra.mxu0 0.0
    %715 = vmatprep.subr.mxu0 0.0
    %716 = vmatpush1.msra.mxu0 0.0
    %717 = vmatprep.subr.mxu0 0.0
    %718 = vmatpush1.msra.mxu0 0.0
    %719 = vmatprep.subr.mxu0 0.0
    %720 = vmatpush1.msra.mxu0 0.0
    %721 = vmatprep.subr.mxu0 0.0
    %722 = vmatpush1.msra.mxu0 0.0
    %723 = vmatprep.subr.mxu0 0.0
    %724 = vmatpush1.msra.mxu0 0.0
    %725 = vmatprep.subr.mxu0 0.0
    %726 = vmatpush1.msra.mxu0 0.0
    %727 = vmatprep.subr.mxu0 0.0
    %728 = vmatpush1.msra.mxu0 0.0
    %729 = vmatprep.subr.mxu0 0.0
    %730 = vmatpush1.msra.mxu0 0.0
    %731 = vmatprep.mubr.f32.mxu0 0.0
    %732 = vmatmul.mubr.f32.gmra.mrb[0].mxu0 %v661
    %v733 = vpop.f32.mrb[0].mxu0
    %v734 = vadd.f32 0.0, %v733
    %v735 = vpop.f32.mrb[0].mxu0
    %736 = vdwg.mxu0
    %v737 = vsub.f32 0.0, %v734
    %v738 = vmul.f32 %v737, 1.442695
    %v739 = vpow.pop %v738
    %v740 = vadd.f32 %v739, 1.0
    %v741 = vrcp.pop %v740
    %v742 = vmul.f32 1.0, %v741
    %v743 = vld [vmem:[#allocation2 + $0x2d8] sm:$0xff]
    %v744 = vld [vmem:[#allocation2 + $0x2e0] sm:$0xff]
    %v745 = vld [vmem:[#allocation2 + $0x2e8] sm:$0xf]
    %v746 = vld [vmem:[#allocation2 + $0x2c0] sm:$0xff]
    %v748 = vsel %vm583, %v742, 0
    %750 = vmatprep.subr.mxu0 0.0
    %751 = vmatpush1.msra.mxu0 %v746
    %752 = vmatprep.subr.mxu0 0.0
    %753 = vmatpush1.msra.mxu0 0.0
    %754 = vmatprep.subr.mxu0 0.0
    %755 = vmatpush1.msra.mxu0 0.0
    %756 = vmatprep.subr.mxu0 0.0
    %757 = vmatpush1.msra.mxu0 0.0
    %758 = vmatprep.subr.mxu0 0.0
    %759 = vmatpush1.msra.mxu0 0.0
    %760 = vmatprep.subr.mxu0 0.0
    %761 = vmatpush1.msra.mxu0 0.0
    %762 = vmatprep.subr.mxu0 0.0
    %763 = vmatpush1.msra.mxu0 0.0
    %764 = vmatprep.subr.mxu0 0.0
    %765 = vmatpush1.msra.mxu0 0.0
    %766 = vmatprep.subr.mxu0 0.0
    %767 = vmatpush1.msra.mxu0 0.0
    %768 = vmatprep.subr.mxu0 0.0
    %769 = vmatpush1.msra.mxu0 0.0
    %770 = vmatprep.subr.mxu0 0.0
    %771 = vmatpush1.msra.mxu0 0.0
    %772 = vmatprep.subr.mxu0 0.0
    %773 = vmatpush1.msra.mxu0 0.0
    %774 = vmatprep.subr.mxu0 0.0
    %775 = vmatpush1.msra.mxu0 0.0
    %776 = vmatprep.subr.mxu0 0.0
    %777 = vmatpush1.msra.mxu0 0.0
    %778 = vmatprep.subr.mxu0 0.0
    %779 = vmatpush1.msra.mxu0 0.0
    %780 = vmatprep.subr.mxu0 0.0
    %781 = vmatpush1.msra.mxu0 0.0
    %782 = vmatprep.subr.mxu0 0.0
    %783 = vmatpush1.msra.mxu0 0.0
    %784 = vmatprep.subr.mxu0 0.0
    %785 = vmatpush1.msra.mxu0 0.0
    %786 = vmatprep.subr.mxu0 0.0
    %787 = vmatpush1.msra.mxu0 0.0
    %788 = vmatprep.subr.mxu0 0.0
    %789 = vmatpush1.msra.mxu0 0.0
    %790 = vmatprep.subr.mxu0 0.0
    %791 = vmatpush1.msra.mxu0 0.0
    %792 = vmatprep.subr.mxu0 0.0
    %793 = vmatpush1.msra.mxu0 0.0
    %794 = vmatprep.subr.mxu0 0.0
    %795 = vmatpush1.msra.mxu0 0.0
    %796 = vmatprep.subr.mxu0 0.0
    %797 = vmatpush1.msra.mxu0 0.0
    %798 = vmatprep.subr.mxu0 0.0
    %799 = vmatpush1.msra.mxu0 0.0
    %800 = vmatprep.subr.mxu0 0.0
    %801 = vmatpush1.msra.mxu0 0.0
    %802 = vmatprep.subr.mxu0 0.0
    %803 = vmatpush1.msra.mxu0 0.0
    %804 = vmatprep.subr.mxu0 0.0
    %805 = vmatpush1.msra.mxu0 0.0
    %806 = vmatprep.subr.mxu0 0.0
    %807 = vmatpush1.msra.mxu0 0.0
    %808 = vmatprep.subr.mxu0 0.0
    %809 = vmatpush1.msra.mxu0 0.0
    %810 = vmatprep.subr.mxu0 0.0
    %811 = vmatpush1.msra.mxu0 0.0
    %812 = vmatprep.subr.mxu0 0.0
    %813 = vmatpush1.msra.mxu0 0.0
    %814 = vmatprep.mubr.f32.mxu0 0.0
    %815 = vmatmul.mubr.f32.gmra.mrb[0].mxu0 %v748
    %v816 = vpop.f32.mrb[0].mxu0
    %v817 = vadd.f32 0.0, %v816
    %v818 = vpop.f32.mrb[0].mxu0
    %819 = vdwg.mxu0
    %v821 = vsel %vm659, %v743, 0
    %v824 = vsel %vm659, %v744, 0
    %v827 = vsel %vm659, %v745, 0
    %v830 = vsel %vm663, %v817, 0
    %832 = vmatprep.subr.mxu0 0.0
    %833 = vmatpush1.msra.mxu0 %v830
    %834 = vmatprep.subr.mxu0 0.0
    %835 = vmatpush1.msra.mxu0 0.0
    %836 = vmatprep.subr.mxu0 0.0
    %837 = vmatpush1.msra.mxu0 0.0
    %838 = vmatprep.subr.mxu0 0.0
    %839 = vmatpush1.msra.mxu0 0.0
    %840 = vmatprep.subr.mxu0 0.0
    %841 = vmatpush1.msra.mxu0 0.0
    %842 = vmatprep.subr.mxu0 0.0
    %843 = vmatpush1.msra.mxu0 0.0
    %844 = vmatprep.subr.mxu0 0.0
    %845 = vmatpush1.msra.mxu0 0.0
    %846 = vmatprep.subr.mxu0 0.0
    %847 = vmatpush1.msra.mxu0 0.0
    %848 = vmatprep.subr.mxu0 0.0
    %849 = vmatpush1.msra.mxu0 0.0
    %850 = vmatprep.subr.mxu0 0.0
    %851 = vmatpush1.msra.mxu0 0.0
    %852 = vmatprep.subr.mxu0 0.0
    %853 = vmatpush1.msra.mxu0 0.0
    %854 = vmatprep.subr.mxu0 0.0
    %855 = vmatpush1.msra.mxu0 0.0
    %856 = vmatprep.subr.mxu0 0.0
    %857 = vmatpush1.msra.mxu0 0.0
    %858 = vmatprep.subr.mxu0 0.0
    %859 = vmatpush1.msra.mxu0 0.0
    %860 = vmatprep.subr.mxu0 0.0
    %861 = vmatpush1.msra.mxu0 0.0
    %862 = vmatprep.subr.mxu0 0.0
    %863 = vmatpush1.msra.mxu0 0.0
    %864 = vmatprep.subr.mxu0 0.0
    %865 = vmatpush1.msra.mxu0 0.0
    %866 = vmatprep.subr.mxu0 0.0
    %867 = vmatpush1.msra.mxu0 0.0
    %868 = vmatprep.subr.mxu0 0.0
    %869 = vmatpush1.msra.mxu0 0.0
    %870 = vmatprep.subr.mxu0 0.0
    %871 = vmatpush1.msra.mxu0 0.0
    %872 = vmatprep.subr.mxu0 0.0
    %873 = vmatpush1.msra.mxu0 0.0
    %874 = vmatprep.subr.mxu0 0.0
    %875 = vmatpush1.msra.mxu0 0.0
    %876 = vmatprep.subr.mxu0 0.0
    %877 = vmatpush1.msra.mxu0 0.0
    %878 = vmatprep.subr.mxu0 0.0
    %879 = vmatpush1.msra.mxu0 0.0
    %880 = vmatprep.subr.mxu0 0.0
    %881 = vmatpush1.msra.mxu0 0.0
    %882 = vmatprep.subr.mxu0 0.0
    %883 = vmatpush1.msra.mxu0 0.0
    %884 = vmatprep.subr.mxu0 0.0
    %885 = vmatpush1.msra.mxu0 0.0
    %886 = vmatprep.subr.mxu0 0.0
    %887 = vmatpush1.msra.mxu0 0.0
    %888 = vmatprep.subr.mxu0 0.0
    %889 = vmatpush1.msra.mxu0 0.0
    %890 = vmatprep.subr.mxu0 0.0
    %891 = vmatpush1.msra.mxu0 0.0
    %892 = vmatprep.subr.mxu0 0.0
    %893 = vmatpush1.msra.mxu0 0.0
    %894 = vmatprep.subr.mxu0 0.0
    %895 = vmatpush1.msra.mxu0 0.0
    %896 = vmatprep.mubr.f32.mxu0 0.0
    %897 = vmatmul.mubr.f32.gmra.mrb[0].mxu0 %v821
    %v898 = vpop.f32.mrb[0].mxu0
    %v899 = vadd.f32 0.0, %v898
    %v900 = vpop.f32.mrb[0].mxu0
    %901 = vmatprep.mubr.f32.mxu0 0.0
    %902 = vmatmul.mubr.f32.gmra.mrb[0].mxu0 %v824
    %v903 = vpop.f32.mrb[0].mxu0
    %v904 = vadd.f32 0.0, %v903
    %v905 = vpop.f32.mrb[0].mxu0
    %906 = vmatprep.mubr.f32.mxu0 0.0
    %907 = vmatmul.mubr.f32.gmra.mrb[0].mxu0 %v827
    %v908 = vpop.f32.mrb[0].mxu0
    %v909 = vadd.f32 0.0, %v908
    %v910 = vpop.f32.mrb[0].mxu0
    %911 = vdwg.mxu0
    %v912 = vmul.f32 %v416, %v899
    %v913 = vmul.f32 %v417, %v904
    %v914 = vmul.f32 %v418, %v909
    %v915 = vld [vmem:[#allocation2 + $0x270] sm:$0xff]
    %v916 = vld [vmem:[#allocation2 + $0x278] sm:$0xff]
    %v917 = vld [vmem:[#allocation2] sm:$0xff]
    %v918 = vld [vmem:[#allocation2 + $0x8] sm:$0xff]
    %v919 = vld [vmem:[#allocation2 + $0x10] sm:$0xff]
    %v920 = vld [vmem:[#allocation2 + $0x18] sm:$0xff]
    %v921 = vld [vmem:[#allocation2 + $0x20] sm:$0xff]
    %v922 = vld [vmem:[#allocation2 + $0x28] sm:$0xff]
    %v923 = vld [vmem:[#allocation2 + $0x30] sm:$0xff]
    %v924 = vld [vmem:[#allocation2 + $0x38] sm:$0xff]
    %v925 = vld [vmem:[#allocation2 + $0x40] sm:$0xff]
    %v926 = vld [vmem:[#allocation2 + $0x48] sm:$0xff]
    %v928 = vsel %vm420, %v915, 0
    %v931 = vsel %vm420, %v916, 0
    %v934 = vsel %vm424, %v914, 0
    %936 = vmatprep.subr.mxu0 0.0
    %937 = vmatpush1.msra.mxu0 %v912
    %938 = vmatprep.subr.mxu0 0.0
    %939 = vmatpush1.msra.mxu0 %v913
    %940 = vmatprep.subr.mxu0 0.0
    %941 = vmatpush1.msra.mxu0 %v934
    %942 = vmatprep.subr.mxu0 0.0
    %943 = vmatpush1.msra.mxu0 0.0
    %944 = vmatprep.subr.mxu0 0.0
    %945 = vmatpush1.msra.mxu0 0.0
    %946 = vmatprep.subr.mxu0 0.0
    %947 = vmatpush1.msra.mxu0 0.0
    %948 = vmatprep.subr.mxu0 0.0
    %949 = vmatpush1.msra.mxu0 0.0
    %950 = vmatprep.subr.mxu0 0.0
    %951 = vmatpush1.msra.mxu0 0.0
    %952 = vmatprep.subr.mxu0 0.0
    %953 = vmatpush1.msra.mxu0 0.0
    %954 = vmatprep.subr.mxu0 0.0
    %955 = vmatpush1.msra.mxu0 0.0
    %956 = vmatprep.subr.mxu0 0.0
    %957 = vmatpush1.msra.mxu0 0.0
    %958 = vmatprep.subr.mxu0 0.0
    %959 = vmatpush1.msra.mxu0 0.0
    %960 = vmatprep.subr.mxu0 0.0
    %961 = vmatpush1.msra.mxu0 0.0
    %962 = vmatprep.subr.mxu0 0.0
    %963 = vmatpush1.msra.mxu0 0.0
    %964 = vmatprep.subr.mxu0 0.0
    %965 = vmatpush1.msra.mxu0 0.0
    %966 = vmatprep.subr.mxu0 0.0
    %967 = vmatpush1.msra.mxu0 0.0
    %968 = vmatprep.subr.mxu0 0.0
    %969 = vmatpush1.msra.mxu0 0.0
    %970 = vmatprep.subr.mxu0 0.0
    %971 = vmatpush1.msra.mxu0 0.0
    %972 = vmatprep.subr.mxu0 0.0
    %973 = vmatpush1.msra.mxu0 0.0
    %974 = vmatprep.subr.mxu0 0.0
    %975 = vmatpush1.msra.mxu0 0.0
    %976 = vmatprep.subr.mxu0 0.0
    %977 = vmatpush1.msra.mxu0 0.0
    %978 = vmatprep.subr.mxu0 0.0
    %979 = vmatpush1.msra.mxu0 0.0
    %980 = vmatprep.subr.mxu0 0.0
    %981 = vmatpush1.msra.mxu0 0.0
    %982 = vmatprep.subr.mxu0 0.0
    %983 = vmatpush1.msra.mxu0 0.0
    %984 = vmatprep.subr.mxu0 0.0
    %985 = vmatpush1.msra.mxu0 0.0
    %986 = vmatprep.subr.mxu0 0.0
    %987 = vmatpush1.msra.mxu0 0.0
    %988 = vmatprep.subr.mxu0 0.0
    %989 = vmatpush1.msra.mxu0 0.0
    %990 = vmatprep.subr.mxu0 0.0
    %991 = vmatpush1.msra.mxu0 0.0
    %992 = vmatprep.subr.mxu0 0.0
    %993 = vmatpush1.msra.mxu0 0.0
    %994 = vmatprep.subr.mxu0 0.0
    %995 = vmatpush1.msra.mxu0 0.0
    %996 = vmatprep.subr.mxu0 0.0
    %997 = vmatpush1.msra.mxu0 0.0
    %998 = vmatprep.subr.mxu0 0.0
    %999 = vmatpush1.msra.mxu0 0.0
    %1000 = vmatprep.mubr.f32.mxu0 0.0
    %1001 = vmatmul.mubr.f32.gmra.mrb[0].mxu0 %v928
    %v1002 = vpop.f32.mrb[0].mxu0
    %v1003 = vadd.f32 0.0, %v1002
    %v1004 = vpop.f32.mrb[0].mxu0
    %1005 = vmatprep.mubr.f32.mxu0 0.0
    %1006 = vmatmul.mubr.f32.gmra.mrb[0].mxu0 %v931
    %v1007 = vpop.f32.mrb[0].mxu0
    %v1008 = vadd.f32 0.0, %v1007
    %v1009 = vpop.f32.mrb[0].mxu0
    %1010 = vdwg.mxu0
    %v1011 = vld [vmem:[#allocation2 + $0x280] sm:$0xff]
    %v1012 = vld [vmem:[#allocation2 + $0x288] sm:$0xff]
    %v1013 = vld [vmem:[#allocation2 + $0x50] sm:$0xff]
    %v1014 = vld [vmem:[#allocation2 + $0x58] sm:$0xff]
    %v1015 = vld [vmem:[#allocation2 + $0x60] sm:$0xff]
    %v1016 = vld [vmem:[#allocation2 + $0x68] sm:$0xff]
    %v1017 = vld [vmem:[#allocation2 + $0x70] sm:$0xff]
    %v1018 = vld [vmem:[#allocation2 + $0x78] sm:$0xff]
    %v1019 = vld [vmem:[#allocation2 + $0x80] sm:$0xff]
    %v1020 = vld [vmem:[#allocation2 + $0x88] sm:$0xff]
    %v1021 = vld [vmem:[#allocation2 + $0x90] sm:$0xff]
    %v1022 = vld [vmem:[#allocation2 + $0x98] sm:$0xff]
    %v1024 = vsel %vm420, %v1011, 0
    %v1027 = vsel %vm420, %v1012, 0
    %1029 = vmatprep.subr.mxu0 0.0
    %1030 = vmatpush1.msra.mxu0 %v912
    %1031 = vmatprep.subr.mxu0 0.0
    %1032 = vmatpush1.msra.mxu0 %v913
    %1033 = vmatprep.subr.mxu0 0.0
    %1034 = vmatpush1.msra.mxu0 %v934
    %1035 = vmatprep.subr.mxu0 0.0
    %1036 = vmatpush1.msra.mxu0 0.0
    %1037 = vmatprep.subr.mxu0 0.0
    %1038 = vmatpush1.msra.mxu0 0.0
    %1039 = vmatprep.subr.mxu0 0.0
    %1040 = vmatpush1.msra.mxu0 0.0
    %1041 = vmatprep.subr.mxu0 0.0
    %1042 = vmatpush1.msra.mxu0 0.0
    %1043 = vmatprep.subr.mxu0 0.0
    %1044 = vmatpush1.msra.mxu0 0.0
    %1045 = vmatprep.subr.mxu0 0.0
    %1046 = vmatpush1.msra.mxu0 0.0
    %1047 = vmatprep.subr.mxu0 0.0
    %1048 = vmatpush1.msra.mxu0 0.0
    %1049 = vmatprep.subr.mxu0 0.0
    %1050 = vmatpush1.msra.mxu0 0.0
    %1051 = vmatprep.subr.mxu0 0.0
    %1052 = vmatpush1.msra.mxu0 0.0
    %1053 = vmatprep.subr.mxu0 0.0
    %1054 = vmatpush1.msra.mxu0 0.0
    %1055 = vmatprep.subr.mxu0 0.0
    %1056 = vmatpush1.msra.mxu0 0.0
    %1057 = vmatprep.subr.mxu0 0.0
    %1058 = vmatpush1.msra.mxu0 0.0
    %1059 = vmatprep.subr.mxu0 0.0
    %1060 = vmatpush1.msra.mxu0 0.0
    %1061 = vmatprep.subr.mxu0 0.0
    %1062 = vmatpush1.msra.mxu0 0.0
    %1063 = vmatprep.subr.mxu0 0.0
    %1064 = vmatpush1.msra.mxu0 0.0
    %1065 = vmatprep.subr.mxu0 0.0
    %1066 = vmatpush1.msra.mxu0 0.0
    %1067 = vmatprep.subr.mxu0 0.0
    %1068 = vmatpush1.msra.mxu0 0.0
    %1069 = vmatprep.subr.mxu0 0.0
    %1070 = vmatpush1.msra.mxu0 0.0
    %1071 = vmatprep.subr.mxu0 0.0
    %1072 = vmatpush1.msra.mxu0 0.0
    %1073 = vmatprep.subr.mxu0 0.0
    %1074 = vmatpush1.msra.mxu0 0.0
    %1075 = vmatprep.subr.mxu0 0.0
    %1076 = vmatpush1.msra.mxu0 0.0
    %1077 = vmatprep.subr.mxu0 0.0
    %1078 = vmatpush1.msra.mxu0 0.0
    %1079 = vmatprep.subr.mxu0 0.0
    %1080 = vmatpush1.msra.mxu0 0.0
    %1081 = vmatprep.subr.mxu0 0.0
    %1082 = vmatpush1.msra.mxu0 0.0
    %1083 = vmatprep.subr.mxu0 0.0
    %1084 = vmatpush1.msra.mxu0 0.0
    %1085 = vmatprep.subr.mxu0 0.0
    %1086 = vmatpush1.msra.mxu0 0.0
    %1087 = vmatprep.subr.mxu0 0.0
    %1088 = vmatpush1.msra.mxu0 0.0
    %1089 = vmatprep.subr.mxu0 0.0
    %1090 = vmatpush1.msra.mxu0 0.0
    %1091 = vmatprep.subr.mxu0 0.0
    %1092 = vmatpush1.msra.mxu0 0.0
    %1093 = vmatprep.mubr.f32.mxu0 0.0
    %1094 = vmatmul.mubr.f32.gmra.mrb[0].mxu0 %v1024
    %v1095 = vpop.f32.mrb[0].mxu0
    %v1096 = vadd.f32 0.0, %v1095
    %v1097 = vpop.f32.mrb[0].mxu0
    %1098 = vmatprep.mubr.f32.mxu0 0.0
    %1099 = vmatmul.mubr.f32.gmra.mrb[0].mxu0 %v1027
    %v1100 = vpop.f32.mrb[0].mxu0
    %v1101 = vadd.f32 0.0, %v1100
    %v1102 = vpop.f32.mrb[0].mxu0
    %1103 = vdwg.mxu0
    %v1105 = vsel %vm508, %v1096, 0
    %v1108 = vsel %vm508, %v1101, 0
    %1110 = vmatprep.subr.mxu0 0.0
    %1111 = vmatpush1.msra.mxu0 %v1013
    %1112 = vmatprep.subr.mxu0 0.0
    %1113 = vmatpush1.msra.mxu0 %v1014
    %1114 = vmatprep.subr.mxu0 0.0
    %1115 = vmatpush1.msra.mxu0 %v1015
    %1116 = vmatprep.subr.mxu0 0.0
    %1117 = vmatpush1.msra.mxu0 %v1016
    %1118 = vmatprep.subr.mxu0 0.0
    %1119 = vmatpush1.msra.mxu0 %v1017
    %1120 = vmatprep.subr.mxu0 0.0
    %1121 = vmatpush1.msra.mxu0 %v1018
    %1122 = vmatprep.subr.mxu0 0.0
    %1123 = vmatpush1.msra.mxu0 %v1019
    %1124 = vmatprep.subr.mxu0 0.0
    %1125 = vmatpush1.msra.mxu0 %v1020
    %1126 = vmatprep.subr.mxu0 0.0
    %1127 = vmatpush1.msra.mxu0 %v1021
    %1128 = vmatprep.subr.mxu0 0.0
    %1129 = vmatpush1.msra.mxu0 %v1022
    %1130 = vmatprep.subr.mxu0 0.0
    %1131 = vmatpush1.msra.mxu0 0.0
    %1132 = vmatprep.subr.mxu0 0.0
    %1133 = vmatpush1.msra.mxu0 0.0
    %1134 = vmatprep.subr.mxu0 0.0
    %1135 = vmatpush1.msra.mxu0 0.0
    %1136 = vmatprep.subr.mxu0 0.0
    %1137 = vmatpush1.msra.mxu0 0.0
    %1138 = vmatprep.subr.mxu0 0.0
    %1139 = vmatpush1.msra.mxu0 0.0
    %1140 = vmatprep.subr.mxu0 0.0
    %1141 = vmatpush1.msra.mxu0 0.0
    %1142 = vmatprep.subr.mxu0 0.0
    %1143 = vmatpush1.msra.mxu0 0.0
    %1144 = vmatprep.subr.mxu0 0.0
    %1145 = vmatpush1.msra.mxu0 0.0
    %1146 = vmatprep.subr.mxu0 0.0
    %1147 = vmatpush1.msra.mxu0 0.0
    %1148 = vmatprep.subr.mxu0 0.0
    %1149 = vmatpush1.msra.mxu0 0.0
    %1150 = vmatprep.subr.mxu0 0.0
    %1151 = vmatpush1.msra.mxu0 0.0
    %1152 = vmatprep.subr.mxu0 0.0
    %1153 = vmatpush1.msra.mxu0 0.0
    %1154 = vmatprep.subr.mxu0 0.0
    %1155 = vmatpush1.msra.mxu0 0.0
    %1156 = vmatprep.subr.mxu0 0.0
    %1157 = vmatpush1.msra.mxu0 0.0
    %1158 = vmatprep.subr.mxu0 0.0
    %1159 = vmatpush1.msra.mxu0 0.0
    %1160 = vmatprep.subr.mxu0 0.0
    %1161 = vmatpush1.msra.mxu0 0.0
    %1162 = vmatprep.subr.mxu0 0.0
    %1163 = vmatpush1.msra.mxu0 0.0
    %1164 = vmatprep.subr.mxu0 0.0
    %1165 = vmatpush1.msra.mxu0 0.0
    %1166 = vmatprep.subr.mxu0 0.0
    %1167 = vmatpush1.msra.mxu0 0.0
    %1168 = vmatprep.subr.mxu0 0.0
    %1169 = vmatpush1.msra.mxu0 0.0
    %1170 = vmatprep.subr.mxu0 0.0
    %1171 = vmatpush1.msra.mxu0 0.0
    %1172 = vmatprep.subr.mxu0 0.0
    %1173 = vmatpush1.msra.mxu0 0.0
    %1174 = vmatprep.mubr.f32.mxu0 0.0
    %1175 = vmatmul.mubr.f32.gmra.mrb[0].mxu0 %v1105
    %v1176 = vpop.f32.mrb[0].mxu0
    %v1177 = vadd.f32 0.0, %v1176
    %v1178 = vpop.f32.mrb[0].mxu0
    %1179 = vmatprep.mubr.f32.mxu0 0.0
    %1180 = vmatmul.mubr.f32.gmra.mrb[0].mxu0 %v1108
    %v1181 = vpop.f32.mrb[0].mxu0
    %v1182 = vadd.f32 0.0, %v1181
    %v1183 = vpop.f32.mrb[0].mxu0
    %1184 = vdwg.mxu0
    %v1186 = vsel %vm508, %v1003, 0
    %v1189 = vsel %vm508, %v1008, 0
    %1191 = vmatprep.subr.mxu0 0.0
    %1192 = vmatpush1.msra.mxu0 %v917
    %1193 = vmatprep.subr.mxu0 0.0
    %1194 = vmatpush1.msra.mxu0 %v918
    %1195 = vmatprep.subr.mxu0 0.0
    %1196 = vmatpush1.msra.mxu0 %v919
    %1197 = vmatprep.subr.mxu0 0.0
    %1198 = vmatpush1.msra.mxu0 %v920
    %1199 = vmatprep.subr.mxu0 0.0
    %1200 = vmatpush1.msra.mxu0 %v921
    %1201 = vmatprep.subr.mxu0 0.0
    %1202 = vmatpush1.msra.mxu0 %v922
    %1203 = vmatprep.subr.mxu0 0.0
    %1204 = vmatpush1.msra.mxu0 %v923
    %1205 = vmatprep.subr.mxu0 0.0
    %1206 = vmatpush1.msra.mxu0 %v924
    %1207 = vmatprep.subr.mxu0 0.0
    %1208 = vmatpush1.msra.mxu0 %v925
    %1209 = vmatprep.subr.mxu0 0.0
    %1210 = vmatpush1.msra.mxu0 %v926
    %1211 = vmatprep.subr.mxu0 0.0
    %1212 = vmatpush1.msra.mxu0 0.0
    %1213 = vmatprep.subr.mxu0 0.0
    %1214 = vmatpush1.msra.mxu0 0.0
    %1215 = vmatprep.subr.mxu0 0.0
    %1216 = vmatpush1.msra.mxu0 0.0
    %1217 = vmatprep.subr.mxu0 0.0
    %1218 = vmatpush1.msra.mxu0 0.0
    %1219 = vmatprep.subr.mxu0 0.0
    %1220 = vmatpush1.msra.mxu0 0.0
    %1221 = vmatprep.subr.mxu0 0.0
    %1222 = vmatpush1.msra.mxu0 0.0
    %1223 = vmatprep.subr.mxu0 0.0
    %1224 = vmatpush1.msra.mxu0 0.0
    %1225 = vmatprep.subr.mxu0 0.0
    %1226 = vmatpush1.msra.mxu0 0.0
    %1227 = vmatprep.subr.mxu0 0.0
    %1228 = vmatpush1.msra.mxu0 0.0
    %1229 = vmatprep.subr.mxu0 0.0
    %1230 = vmatpush1.msra.mxu0 0.0
    %1231 = vmatprep.subr.mxu0 0.0
    %1232 = vmatpush1.msra.mxu0 0.0
    %1233 = vmatprep.subr.mxu0 0.0
    %1234 = vmatpush1.msra.mxu0 0.0
    %1235 = vmatprep.subr.mxu0 0.0
    %1236 = vmatpush1.msra.mxu0 0.0
    %1237 = vmatprep.subr.mxu0 0.0
    %1238 = vmatpush1.msra.mxu0 0.0
    %1239 = vmatprep.subr.mxu0 0.0
    %1240 = vmatpush1.msra.mxu0 0.0
    %1241 = vmatprep.subr.mxu0 0.0
    %1242 = vmatpush1.msra.mxu0 0.0
    %1243 = vmatprep.subr.mxu0 0.0
    %1244 = vmatpush1.msra.mxu0 0.0
    %1245 = vmatprep.subr.mxu0 0.0
    %1246 = vmatpush1.msra.mxu0 0.0
    %1247 = vmatprep.subr.mxu0 0.0
    %1248 = vmatpush1.msra.mxu0 0.0
    %1249 = vmatprep.subr.mxu0 0.0
    %1250 = vmatpush1.msra.mxu0 0.0
    %1251 = vmatprep.subr.mxu0 0.0
    %1252 = vmatpush1.msra.mxu0 0.0
    %1253 = vmatprep.subr.mxu0 0.0
    %1254 = vmatpush1.msra.mxu0 0.0
    %1255 = vmatprep.mubr.f32.mxu0 0.0
    %1256 = vmatmul.mubr.f32.gmra.mrb[0].mxu0 %v1186
    %v1257 = vpop.f32.mrb[0].mxu0
    %v1258 = vadd.f32 %v1177, %v1257
    %v1259 = vpop.f32.mrb[0].mxu0
    %1260 = vmatprep.mubr.f32.mxu0 0.0
    %1261 = vmatmul.mubr.f32.gmra.mrb[0].mxu0 %v1189
    %v1262 = vpop.f32.mrb[0].mxu0
    %v1263 = vadd.f32 %v1182, %v1262
    %v1264 = vpop.f32.mrb[0].mxu0
    %1265 = vdwg.mxu0
    %v1266 = vld [vmem:[#allocation2 + $0x290] sm:$0xff]
    %v1267 = vld [vmem:[#allocation2 + $0x298] sm:$0xff]
    %v1268 = vld [vmem:[#allocation2 + $0xa0] sm:$0xff]
    %v1269 = vld [vmem:[#allocation2 + $0xa8] sm:$0xff]
    %v1270 = vld [vmem:[#allocation2 + $0xb0] sm:$0xff]
    %v1271 = vld [vmem:[#allocation2 + $0xb8] sm:$0xff]
    %v1272 = vld [vmem:[#allocation2 + $0xc0] sm:$0xff]
    %v1273 = vld [vmem:[#allocation2 + $0xc8] sm:$0xff]
    %v1274 = vld [vmem:[#allocation2 + $0xd0] sm:$0xff]
    %v1275 = vld [vmem:[#allocation2 + $0xd8] sm:$0xff]
    %v1276 = vld [vmem:[#allocation2 + $0xe0] sm:$0xff]
    %v1277 = vld [vmem:[#allocation2 + $0xe8] sm:$0xff]
    %v1279 = vsel %vm420, %v1266, 0
    %v1282 = vsel %vm420, %v1267, 0
    %1284 = vmatprep.subr.mxu0 0.0
    %1285 = vmatpush1.msra.mxu0 %v912
    %1286 = vmatprep.subr.mxu0 0.0
    %1287 = vmatpush1.msra.mxu0 %v913
    %1288 = vmatprep.subr.mxu0 0.0
    %1289 = vmatpush1.msra.mxu0 %v934
    %1290 = vmatprep.subr.mxu0 0.0
    %1291 = vmatpush1.msra.mxu0 0.0
    %1292 = vmatprep.subr.mxu0 0.0
    %1293 = vmatpush1.msra.mxu0 0.0
    %1294 = vmatprep.subr.mxu0 0.0
    %1295 = vmatpush1.msra.mxu0 0.0
    %1296 = vmatprep.subr.mxu0 0.0
    %1297 = vmatpush1.msra.mxu0 0.0
    %1298 = vmatprep.subr.mxu0 0.0
    %1299 = vmatpush1.msra.mxu0 0.0
    %1300 = vmatprep.subr.mxu0 0.0
    %1301 = vmatpush1.msra.mxu0 0.0
    %1302 = vmatprep.subr.mxu0 0.0
    %1303 = vmatpush1.msra.mxu0 0.0
    %1304 = vmatprep.subr.mxu0 0.0
    %1305 = vmatpush1.msra.mxu0 0.0
    %1306 = vmatprep.subr.mxu0 0.0
    %1307 = vmatpush1.msra.mxu0 0.0
    %1308 = vmatprep.subr.mxu0 0.0
    %1309 = vmatpush1.msra.mxu0 0.0
    %1310 = vmatprep.subr.mxu0 0.0
    %1311 = vmatpush1.msra.mxu0 0.0
    %1312 = vmatprep.subr.mxu0 0.0
    %1313 = vmatpush1.msra.mxu0 0.0
    %1314 = vmatprep.subr.mxu0 0.0
    %1315 = vmatpush1.msra.mxu0 0.0
    %1316 = vmatprep.subr.mxu0 0.0
    %1317 = vmatpush1.msra.mxu0 0.0
    %1318 = vmatprep.subr.mxu0 0.0
    %1319 = vmatpush1.msra.mxu0 0.0
    %1320 = vmatprep.subr.mxu0 0.0
    %1321 = vmatpush1.msra.mxu0 0.0
    %1322 = vmatprep.subr.mxu0 0.0
    %1323 = vmatpush1.msra.mxu0 0.0
    %1324 = vmatprep.subr.mxu0 0.0
    %1325 = vmatpush1.msra.mxu0 0.0
    %1326 = vmatprep.subr.mxu0 0.0
    %1327 = vmatpush1.msra.mxu0 0.0
    %1328 = vmatprep.subr.mxu0 0.0
    %1329 = vmatpush1.msra.mxu0 0.0
    %1330 = vmatprep.subr.mxu0 0.0
    %1331 = vmatpush1.msra.mxu0 0.0
    %1332 = vmatprep.subr.mxu0 0.0
    %1333 = vmatpush1.msra.mxu0 0.0
    %1334 = vmatprep.subr.mxu0 0.0
    %1335 = vmatpush1.msra.mxu0 0.0
    %1336 = vmatprep.subr.mxu0 0.0
    %1337 = vmatpush1.msra.mxu0 0.0
    %1338 = vmatprep.subr.mxu0 0.0
    %1339 = vmatpush1.msra.mxu0 0.0
    %1340 = vmatprep.subr.mxu0 0.0
    %1341 = vmatpush1.msra.mxu0 0.0
    %1342 = vmatprep.subr.mxu0 0.0
    %1343 = vmatpush1.msra.mxu0 0.0
    %1344 = vmatprep.subr.mxu0 0.0
    %1345 = vmatpush1.msra.mxu0 0.0
    %1346 = vmatprep.subr.mxu0 0.0
    %1347 = vmatpush1.msra.mxu0 0.0
    %1348 = vmatprep.mubr.f32.mxu0 0.0
    %1349 = vmatmul.mubr.f32.gmra.mrb[0].mxu0 %v1279
    %v1350 = vpop.f32.mrb[0].mxu0
    %v1351 = vadd.f32 0.0, %v1350
    %v1352 = vpop.f32.mrb[0].mxu0
    %1353 = vmatprep.mubr.f32.mxu0 0.0
    %1354 = vmatmul.mubr.f32.gmra.mrb[0].mxu0 %v1282
    %v1355 = vpop.f32.mrb[0].mxu0
    %v1356 = vadd.f32 0.0, %v1355
    %v1357 = vpop.f32.mrb[0].mxu0
    %1358 = vdwg.mxu0
    %v1360 = vsel %vm508, %v1351, 0
    %v1363 = vsel %vm508, %v1356, 0
    %1365 = vmatprep.subr.mxu0 0.0
    %1366 = vmatpush1.msra.mxu0 %v1268
    %1367 = vmatprep.subr.mxu0 0.0
    %1368 = vmatpush1.msra.mxu0 %v1269
    %1369 = vmatprep.subr.mxu0 0.0
    %1370 = vmatpush1.msra.mxu0 %v1270
    %1371 = vmatprep.subr.mxu0 0.0
    %1372 = vmatpush1.msra.mxu0 %v1271
    %1373 = vmatprep.subr.mxu0 0.0
    %1374 = vmatpush1.msra.mxu0 %v1272
    %1375 = vmatprep.subr.mxu0 0.0
    %1376 = vmatpush1.msra.mxu0 %v1273
    %1377 = vmatprep.subr.mxu0 0.0
    %1378 = vmatpush1.msra.mxu0 %v1274
    %1379 = vmatprep.subr.mxu0 0.0
    %1380 = vmatpush1.msra.mxu0 %v1275
    %1381 = vmatprep.subr.mxu0 0.0
    %1382 = vmatpush1.msra.mxu0 %v1276
    %1383 = vmatprep.subr.mxu0 0.0
    %1384 = vmatpush1.msra.mxu0 %v1277
    %1385 = vmatprep.subr.mxu0 0.0
    %1386 = vmatpush1.msra.mxu0 0.0
    %1387 = vmatprep.subr.mxu0 0.0
    %1388 = vmatpush1.msra.mxu0 0.0
    %1389 = vmatprep.subr.mxu0 0.0
    %1390 = vmatpush1.msra.mxu0 0.0
    %1391 = vmatprep.subr.mxu0 0.0
    %1392 = vmatpush1.msra.mxu0 0.0
    %1393 = vmatprep.subr.mxu0 0.0
    %1394 = vmatpush1.msra.mxu0 0.0
    %1395 = vmatprep.subr.mxu0 0.0
    %1396 = vmatpush1.msra.mxu0 0.0
    %1397 = vmatprep.subr.mxu0 0.0
    %1398 = vmatpush1.msra.mxu0 0.0
    %1399 = vmatprep.subr.mxu0 0.0
    %1400 = vmatpush1.msra.mxu0 0.0
    %1401 = vmatprep.subr.mxu0 0.0
    %1402 = vmatpush1.msra.mxu0 0.0
    %1403 = vmatprep.subr.mxu0 0.0
    %1404 = vmatpush1.msra.mxu0 0.0
    %1405 = vmatprep.subr.mxu0 0.0
    %1406 = vmatpush1.msra.mxu0 0.0
    %1407 = vmatprep.subr.mxu0 0.0
    %1408 = vmatpush1.msra.mxu0 0.0
    %1409 = vmatprep.subr.mxu0 0.0
    %1410 = vmatpush1.msra.mxu0 0.0
    %1411 = vmatprep.subr.mxu0 0.0
    %1412 = vmatpush1.msra.mxu0 0.0
    %1413 = vmatprep.subr.mxu0 0.0
    %1414 = vmatpush1.msra.mxu0 0.0
    %1415 = vmatprep.subr.mxu0 0.0
    %1416 = vmatpush1.msra.mxu0 0.0
    %1417 = vmatprep.subr.mxu0 0.0
    %1418 = vmatpush1.msra.mxu0 0.0
    %1419 = vmatprep.subr.mxu0 0.0
    %1420 = vmatpush1.msra.mxu0 0.0
    %1421 = vmatprep.subr.mxu0 0.0
    %1422 = vmatpush1.msra.mxu0 0.0
    %1423 = vmatprep.subr.mxu0 0.0
    %1424 = vmatpush1.msra.mxu0 0.0
    %1425 = vmatprep.subr.mxu0 0.0
    %1426 = vmatpush1.msra.mxu0 0.0
    %1427 = vmatprep.subr.mxu0 0.0
    %1428 = vmatpush1.msra.mxu0 0.0
    %1429 = vmatprep.mubr.f32.mxu0 0.0
    %1430 = vmatmul.mubr.f32.gmra.mrb[0].mxu0 %v1360
    %v1431 = vpop.f32.mrb[0].mxu0
    %v1432 = vadd.f32 0.0, %v1431
    %v1433 = vpop.f32.mrb[0].mxu0
    %1434 = vmatprep.mubr.f32.mxu0 0.0
    %1435 = vmatmul.mubr.f32.gmra.mrb[0].mxu0 %v1363
    %v1436 = vpop.f32.mrb[0].mxu0
    %v1437 = vadd.f32 0.0, %v1436
    %v1438 = vpop.f32.mrb[0].mxu0
    %1439 = vdwg.mxu0
    %v1440 = vadd.f32 %v1258, %v1432
    %v1441 = vadd.f32 %v1263, %v1437
    %v1442 = vld [vmem:[#allocation2 + $0x378] sm:$0x1]
    %v1443 = vlaneseq
    %v1444 = vshrl.u32 %v1443, 7
    %v1445 = vsub.s32 0, %v1444
    %v1446 = vrot.slane %v1442, %v1445
    %v1447 = vadd.f32 %v1440, %v1446
    %v1448 = vadd.f32 %v1441, %v1446
    %v1449 = vld [vmem:[#allocation2 + $0x308] sm:$0x3]
    %vm1450 = vcmask 130048
    %v1452 = vsel %vm1450, %v1449, 0
    %1454 = vmatprep.subr.mxu0 0.0
    %1455 = vmatpush1.msra.mxu0 %v1447
    %1456 = vmatprep.subr.mxu0 0.0
    %1457 = vmatpush1.msra.mxu0 %v1448
    %1458 = vmatprep.subr.mxu0 0.0
    %1459 = vmatpush1.msra.mxu0 0.0
    %1460 = vmatprep.subr.mxu0 0.0
    %1461 = vmatpush1.msra.mxu0 0.0
    %1462 = vmatprep.subr.mxu0 0.0
    %1463 = vmatpush1.msra.mxu0 0.0
    %1464 = vmatprep.subr.mxu0 0.0
    %1465 = vmatpush1.msra.mxu0 0.0
    %1466 = vmatprep.subr.mxu0 0.0
    %1467 = vmatpush1.msra.mxu0 0.0
    %1468 = vmatprep.subr.mxu0 0.0
    %1469 = vmatpush1.msra.mxu0 0.0
    %1470 = vmatprep.subr.mxu0 0.0
    %1471 = vmatpush1.msra.mxu0 0.0
    %1472 = vmatprep.subr.mxu0 0.0
    %1473 = vmatpush1.msra.mxu0 0.0
    %1474 = vmatprep.subr.mxu0 0.0
    %1475 = vmatpush1.msra.mxu0 0.0
    %1476 = vmatprep.subr.mxu0 0.0
    %1477 = vmatpush1.msra.mxu0 0.0
    %1478 = vmatprep.subr.mxu0 0.0
    %1479 = vmatpush1.msra.mxu0 0.0
    %1480 = vmatprep.subr.mxu0 0.0
    %1481 = vmatpush1.msra.mxu0 0.0
    %1482 = vmatprep.subr.mxu0 0.0
    %1483 = vmatpush1.msra.mxu0 0.0
    %1484 = vmatprep.subr.mxu0 0.0
    %1485 = vmatpush1.msra.mxu0 0.0
    %1486 = vmatprep.subr.mxu0 0.0
    %1487 = vmatpush1.msra.mxu0 0.0
    %1488 = vmatprep.subr.mxu0 0.0
    %1489 = vmatpush1.msra.mxu0 0.0
    %1490 = vmatprep.subr.mxu0 0.0
    %1491 = vmatpush1.msra.mxu0 0.0
    %1492 = vmatprep.subr.mxu0 0.0
    %1493 = vmatpush1.msra.mxu0 0.0
    %1494 = vmatprep.subr.mxu0 0.0
    %1495 = vmatpush1.msra.mxu0 0.0
    %1496 = vmatprep.subr.mxu0 0.0
    %1497 = vmatpush1.msra.mxu0 0.0
    %1498 = vmatprep.subr.mxu0 0.0
    %1499 = vmatpush1.msra.mxu0 0.0
    %1500 = vmatprep.subr.mxu0 0.0
    %1501 = vmatpush1.msra.mxu0 0.0
    %1502 = vmatprep.subr.mxu0 0.0
    %1503 = vmatpush1.msra.mxu0 0.0
    %1504 = vmatprep.subr.mxu0 0.0
    %1505 = vmatpush1.msra.mxu0 0.0
    %1506 = vmatprep.subr.mxu0 0.0
    %1507 = vmatpush1.msra.mxu0 0.0
    %1508 = vmatprep.subr.mxu0 0.0
    %1509 = vmatpush1.msra.mxu0 0.0
    %1510 = vmatprep.subr.mxu0 0.0
    %1511 = vmatpush1.msra.mxu0 0.0
    %1512 = vmatprep.subr.mxu0 0.0
    %1513 = vmatpush1.msra.mxu0 0.0
    %1514 = vmatprep.subr.mxu0 0.0
    %1515 = vmatpush1.msra.mxu0 0.0
    %1516 = vmatprep.subr.mxu0 0.0
    %1517 = vmatpush1.msra.mxu0 0.0
    %1518 = vmatprep.mubr.f32.mxu0 0.0
    %1519 = vmatmul.mubr.f32.gmra.mrb[0].mxu0 %v1452
    %v1520 = vpop.f32.mrb[0].mxu0
    %v1521 = vadd.f32 0.0, %v1520
    %v1522 = vpop.f32.mrb[0].mxu0
    %1523 = vdwg.mxu0
    %v1524 = vld [vmem:[#allocation2 + $0x170] sm:$0xff]
    %v1525 = vld [vmem:[#allocation2 + $0x178] sm:$0xff]
    %v1526 = vld [vmem:[#allocation2 + $0x180] sm:$0xff]
    %v1527 = vld [vmem:[#allocation2 + $0x188] sm:$0xff]
    %v1528 = vld [vmem:[#allocation2 + $0x190] sm:$0xff]
    %v1529 = vld [vmem:[#allocation2 + $0x198] sm:$0xff]
    %v1530 = vld [vmem:[#allocation2 + $0x1a0] sm:$0xff]
    %v1531 = vld [vmem:[#allocation2 + $0x1a8] sm:$0xff]
    %v1532 = vld [vmem:[#allocation2 + $0x1b0] sm:$0xff]
    %v1533 = vld [vmem:[#allocation2 + $0x1b8] sm:$0xff]
    %v1534 = vld [vmem:[#allocation2 + $0x1c0] sm:$0xff]
    %v1535 = vld [vmem:[#allocation2 + $0x1c8] sm:$0xff]
    %v1536 = vld [vmem:[#allocation2 + $0x1d0] sm:$0xff]
    %v1537 = vld [vmem:[#allocation2 + $0x1d8] sm:$0xff]
    %v1538 = vld [vmem:[#allocation2 + $0x1e0] sm:$0xff]
    %v1539 = vld [vmem:[#allocation2 + $0x1e8] sm:$0xff]
    %1540 = vmatprep.subr.mxu0 0.0
    %1541 = vmatpush1.msra.mxu0 %v1524
    %1542 = vmatprep.subr.mxu0 0.0
    %1543 = vmatpush1.msra.mxu0 %v1525
    %1544 = vmatprep.subr.mxu0 0.0
    %1545 = vmatpush1.msra.mxu0 %v1526
    %1546 = vmatprep.subr.mxu0 0.0
    %1547 = vmatpush1.msra.mxu0 %v1527
    %1548 = vmatprep.subr.mxu0 0.0
    %1549 = vmatpush1.msra.mxu0 %v1528
    %1550 = vmatprep.subr.mxu0 0.0
    %1551 = vmatpush1.msra.mxu0 %v1529
    %1552 = vmatprep.subr.mxu0 0.0
    %1553 = vmatpush1.msra.mxu0 %v1530
    %1554 = vmatprep.subr.mxu0 0.0
    %1555 = vmatpush1.msra.mxu0 %v1531
    %1556 = vmatprep.subr.mxu0 0.0
    %1557 = vmatpush1.msra.mxu0 %v1532
    %1558 = vmatprep.subr.mxu0 0.0
    %1559 = vmatpush1.msra.mxu0 %v1533
    %1560 = vmatprep.subr.mxu0 0.0
    %1561 = vmatpush1.msra.mxu0 %v1534
    %1562 = vmatprep.subr.mxu0 0.0
    %1563 = vmatpush1.msra.mxu0 %v1535
    %1564 = vmatprep.subr.mxu0 0.0
    %1565 = vmatpush1.msra.mxu0 %v1536
    %1566 = vmatprep.subr.mxu0 0.0
    %1567 = vmatpush1.msra.mxu0 %v1537
    %1568 = vmatprep.subr.mxu0 0.0
    %1569 = vmatpush1.msra.mxu0 %v1538
    %1570 = vmatprep.subr.mxu0 0.0
    %1571 = vmatpush1.msra.mxu0 %v1539
    %1572 = vmatprep.subr.mxu0 0.0
    %1573 = vmatpush1.msra.mxu0 0.0
    %1574 = vmatprep.subr.mxu0 0.0
    %1575 = vmatpush1.msra.mxu0 0.0
    %1576 = vmatprep.subr.mxu0 0.0
    %1577 = vmatpush1.msra.mxu0 0.0
    %1578 = vmatprep.subr.mxu0 0.0
    %1579 = vmatpush1.msra.mxu0 0.0
    %1580 = vmatprep.subr.mxu0 0.0
    %1581 = vmatpush1.msra.mxu0 0.0
    %1582 = vmatprep.subr.mxu0 0.0
    %1583 = vmatpush1.msra.mxu0 0.0
    %1584 = vmatprep.subr.mxu0 0.0
    %1585 = vmatpush1.msra.mxu0 0.0
    %1586 = vmatprep.subr.mxu0 0.0
    %1587 = vmatpush1.msra.mxu0 0.0
    %1588 = vmatprep.subr.mxu0 0.0
    %1589 = vmatpush1.msra.mxu0 0.0
    %1590 = vmatprep.subr.mxu0 0.0
    %1591 = vmatpush1.msra.mxu0 0.0
    %1592 = vmatprep.subr.mxu0 0.0
    %1593 = vmatpush1.msra.mxu0 0.0
    %1594 = vmatprep.subr.mxu0 0.0
    %1595 = vmatpush1.msra.mxu0 0.0
    %1596 = vmatprep.subr.mxu0 0.0
    %1597 = vmatpush1.msra.mxu0 0.0
    %1598 = vmatprep.subr.mxu0 0.0
    %1599 = vmatpush1.msra.mxu0 0.0
    %1600 = vmatprep.subr.mxu0 0.0
    %1601 = vmatpush1.msra.mxu0 0.0
    %1602 = vmatprep.subr.mxu0 0.0
    %1603 = vmatpush1.msra.mxu0 0.0
    %1604 = vmatprep.mubr.f32.mxu0 0.0
    %1605 = vmatmul.mubr.f32.gmra.mrb[0].mxu0 %v1521
    %v1606 = vpop.f32.mrb[0].mxu0
    %v1607 = vadd.f32 0.0, %v1606
    %v1608 = vpop.f32.mrb[0].mxu0
    %1609 = vdwg.mxu0
    %v1610 = vld [vmem:[#allocation2 + $0x358] sm:$0xff]
    %v1611 = vld [vmem:[#allocation2 + $0x360] sm:$0xff]
    %v1613 = vsel %vm1450, %v1607, 0
    %1615 = vmatprep.subr.mxu0 0.0
    %1616 = vmatpush1.msra.mxu0 %v1610
    %1617 = vmatprep.subr.mxu0 0.0
    %1618 = vmatpush1.msra.mxu0 %v1611
    %1619 = vmatprep.subr.mxu0 0.0
    %1620 = vmatpush1.msra.mxu0 0.0
    %1621 = vmatprep.subr.mxu0 0.0
    %1622 = vmatpush1.msra.mxu0 0.0
    %1623 = vmatprep.subr.mxu0 0.0
    %1624 = vmatpush1.msra.mxu0 0.0
    %1625 = vmatprep.subr.mxu0 0.0
    %1626 = vmatpush1.msra.mxu0 0.0
    %1627 = vmatprep.subr.mxu0 0.0
    %1628 = vmatpush1.msra.mxu0 0.0
    %1629 = vmatprep.subr.mxu0 0.0
    %1630 = vmatpush1.msra.mxu0 0.0
    %1631 = vmatprep.subr.mxu0 0.0
    %1632 = vmatpush1.msra.mxu0 0.0
    %1633 = vmatprep.subr.mxu0 0.0
    %1634 = vmatpush1.msra.mxu0 0.0
    %1635 = vmatprep.subr.mxu0 0.0
    %1636 = vmatpush1.msra.mxu0 0.0
    %1637 = vmatprep.subr.mxu0 0.0
    %1638 = vmatpush1.msra.mxu0 0.0
    %1639 = vmatprep.subr.mxu0 0.0
    %1640 = vmatpush1.msra.mxu0 0.0
    %1641 = vmatprep.subr.mxu0 0.0
    %1642 = vmatpush1.msra.mxu0 0.0
    %1643 = vmatprep.subr.mxu0 0.0
    %1644 = vmatpush1.msra.mxu0 0.0
    %1645 = vmatprep.subr.mxu0 0.0
    %1646 = vmatpush1.msra.mxu0 0.0
    %1647 = vmatprep.subr.mxu0 0.0
    %1648 = vmatpush1.msra.mxu0 0.0
    %1649 = vmatprep.subr.mxu0 0.0
    %1650 = vmatpush1.msra.mxu0 0.0
    %1651 = vmatprep.subr.mxu0 0.0
    %1652 = vmatpush1.msra.mxu0 0.0
    %1653 = vmatprep.subr.mxu0 0.0
    %1654 = vmatpush1.msra.mxu0 0.0
    %1655 = vmatprep.subr.mxu0 0.0
    %1656 = vmatpush1.msra.mxu0 0.0
    %1657 = vmatprep.subr.mxu0 0.0
    %1658 = vmatpush1.msra.mxu0 0.0
    %1659 = vmatprep.subr.mxu0 0.0
    %1660 = vmatpush1.msra.mxu0 0.0
    %1661 = vmatprep.subr.mxu0 0.0
    %1662 = vmatpush1.msra.mxu0 0.0
    %1663 = vmatprep.subr.mxu0 0.0
    %1664 = vmatpush1.msra.mxu0 0.0
    %1665 = vmatprep.subr.mxu0 0.0
    %1666 = vmatpush1.msra.mxu0 0.0
    %1667 = vmatprep.subr.mxu0 0.0
    %1668 = vmatpush1.msra.mxu0 0.0
    %1669 = vmatprep.subr.mxu0 0.0
    %1670 = vmatpush1.msra.mxu0 0.0
    %1671 = vmatprep.subr.mxu0 0.0
    %1672 = vmatpush1.msra.mxu0 0.0
    %1673 = vmatprep.subr.mxu0 0.0
    %1674 = vmatpush1.msra.mxu0 0.0
    %1675 = vmatprep.subr.mxu0 0.0
    %1676 = vmatpush1.msra.mxu0 0.0
    %1677 = vmatprep.subr.mxu0 0.0
    %1678 = vmatpush1.msra.mxu0 0.0
    %1679 = vmatprep.mubr.f32.mxu0 0.0
    %1680 = vmatmul.mubr.f32.gmra.mrb[0].mxu0 %v1613
    %v1681 = vpop.f32.mrb[0].mxu0
    %v1682 = vadd.f32 0.0, %v1681
    %v1683 = vpop.f32.mrb[0].mxu0
    %1684 = vdwg.mxu0
    %v1685 = vmax.f32 %v1682, 0.0
    %v1686 = vld [vmem:[#allocation2 + $0x368] sm:$0xf]
    %vm1687 = vcmask 31744
    %v1689 = vsel %vm1687, %v1685, 0
    %v1692 = vsel %vm424, %v1686, 0
    %1694 = vmatprep.subr.mxu0 0.0
    %1695 = vmatpush1.msra.mxu0 %v1692
    %1696 = vmatprep.subr.mxu0 0.0
    %1697 = vmatpush1.msra.mxu0 0.0
    %1698 = vmatprep.subr.mxu0 0.0
    %1699 = vmatpush1.msra.mxu0 0.0
    %1700 = vmatprep.subr.mxu0 0.0
    %1701 = vmatpush1.msra.mxu0 0.0
    %1702 = vmatprep.subr.mxu0 0.0
    %1703 = vmatpush1.msra.mxu0 0.0
    %1704 = vmatprep.subr.mxu0 0.0
    %1705 = vmatpush1.msra.mxu0 0.0
    %1706 = vmatprep.subr.mxu0 0.0
    %1707 = vmatpush1.msra.mxu0 0.0
    %1708 = vmatprep.subr.mxu0 0.0
    %1709 = vmatpush1.msra.mxu0 0.0
    %1710 = vmatprep.subr.mxu0 0.0
    %1711 = vmatpush1.msra.mxu0 0.0
    %1712 = vmatprep.subr.mxu0 0.0
    %1713 = vmatpush1.msra.mxu0 0.0
    %1714 = vmatprep.subr.mxu0 0.0
    %1715 = vmatpush1.msra.mxu0 0.0
    %1716 = vmatprep.subr.mxu0 0.0
    %1717 = vmatpush1.msra.mxu0 0.0
    %1718 = vmatprep.subr.mxu0 0.0
    %1719 = vmatpush1.msra.mxu0 0.0
    %1720 = vmatprep.subr.mxu0 0.0
    %1721 = vmatpush1.msra.mxu0 0.0
    %1722 = vmatprep.subr.mxu0 0.0
    %1723 = vmatpush1.msra.mxu0 0.0
    %1724 = vmatprep.subr.mxu0 0.0
    %1725 = vmatpush1.msra.mxu0 0.0
    %1726 = vmatprep.subr.mxu0 0.0
    %1727 = vmatpush1.msra.mxu0 0.0
    %1728 = vmatprep.subr.mxu0 0.0
    %1729 = vmatpush1.msra.mxu0 0.0
    %1730 = vmatprep.subr.mxu0 0.0
    %1731 = vmatpush1.msra.mxu0 0.0
    %1732 = vmatprep.subr.mxu0 0.0
    %1733 = vmatpush1.msra.mxu0 0.0
    %1734 = vmatprep.subr.mxu0 0.0
    %1735 = vmatpush1.msra.mxu0 0.0
    %1736 = vmatprep.subr.mxu0 0.0
    %1737 = vmatpush1.msra.mxu0 0.0
    %1738 = vmatprep.subr.mxu0 0.0
    %1739 = vmatpush1.msra.mxu0 0.0
    %1740 = vmatprep.subr.mxu0 0.0
    %1741 = vmatpush1.msra.mxu0 0.0
    %1742 = vmatprep.subr.mxu0 0.0
    %1743 = vmatpush1.msra.mxu0 0.0
    %1744 = vmatprep.subr.mxu0 0.0
    %1745 = vmatpush1.msra.mxu0 0.0
    %1746 = vmatprep.subr.mxu0 0.0
    %1747 = vmatpush1.msra.mxu0 0.0
    %1748 = vmatprep.subr.mxu0 0.0
    %1749 = vmatpush1.msra.mxu0 0.0
    %1750 = vmatprep.subr.mxu0 0.0
    %1751 = vmatpush1.msra.mxu0 0.0
    %1752 = vmatprep.subr.mxu0 0.0
    %1753 = vmatpush1.msra.mxu0 0.0
    %1754 = vmatprep.subr.mxu0 0.0
    %1755 = vmatpush1.msra.mxu0 0.0
    %1756 = vmatprep.subr.mxu0 0.0
    %1757 = vmatpush1.msra.mxu0 0.0
    %1758 = vmatprep.mubr.f32.mxu0 0.0
    %1759 = vmatmul.mubr.f32.gmra.mrb[0].mxu0 %v1689
    %v1760 = vpop.f32.mrb[0].mxu0
    %v1761 = vadd.f32 0.0, %v1760
    %v1762 = vpop.f32.mrb[0].mxu0
    %1763 = vdwg.mxu0
    %v1764 = vsub.f32 0.0, %v1761
    %v1765 = vmul.f32 %v1764, 1.442695
    %v1766 = vpow.pop %v1765
    %v1767 = vadd.f32 %v1766, 1.0
    %v1768 = vrcp.pop %v1767
    %v1769 = vmul.f32 1.0, %v1768
    %v1770 = vld [vmem:[#allocation2 + $0x2f0] sm:$0xff]
    %v1771 = vld [vmem:[#allocation2 + $0x2f8] sm:$0xff]
    %v1772 = vld [vmem:[#allocation2 + $0x2c8] sm:$0xff]
    %v1773 = vld [vmem:[#allocation2 + $0x2d0] sm:$0xff]
    %v1775 = vsel %vm1450, %v1769, 0
    %1777 = vmatprep.subr.mxu0 0.0
    %1778 = vmatpush1.msra.mxu0 %v1772
    %1779 = vmatprep.subr.mxu0 0.0
    %1780 = vmatpush1.msra.mxu0 %v1773
    %1781 = vmatprep.subr.mxu0 0.0
    %1782 = vmatpush1.msra.mxu0 0.0
    %1783 = vmatprep.subr.mxu0 0.0
    %1784 = vmatpush1.msra.mxu0 0.0
    %1785 = vmatprep.subr.mxu0 0.0
    %1786 = vmatpush1.msra.mxu0 0.0
    %1787 = vmatprep.subr.mxu0 0.0
    %1788 = vmatpush1.msra.mxu0 0.0
    %1789 = vmatprep.subr.mxu0 0.0
    %1790 = vmatpush1.msra.mxu0 0.0
    %1791 = vmatprep.subr.mxu0 0.0
    %1792 = vmatpush1.msra.mxu0 0.0
    %1793 = vmatprep.subr.mxu0 0.0
    %1794 = vmatpush1.msra.mxu0 0.0
    %1795 = vmatprep.subr.mxu0 0.0
    %1796 = vmatpush1.msra.mxu0 0.0
    %1797 = vmatprep.subr.mxu0 0.0
    %1798 = vmatpush1.msra.mxu0 0.0
    %1799 = vmatprep.subr.mxu0 0.0
    %1800 = vmatpush1.msra.mxu0 0.0
    %1801 = vmatprep.subr.mxu0 0.0
    %1802 = vmatpush1.msra.mxu0 0.0
    %1803 = vmatprep.subr.mxu0 0.0
    %1804 = vmatpush1.msra.mxu0 0.0
    %1805 = vmatprep.subr.mxu0 0.0
    %1806 = vmatpush1.msra.mxu0 0.0
    %1807 = vmatprep.subr.mxu0 0.0
    %1808 = vmatpush1.msra.mxu0 0.0
    %1809 = vmatprep.subr.mxu0 0.0
    %1810 = vmatpush1.msra.mxu0 0.0
    %1811 = vmatprep.subr.mxu0 0.0
    %1812 = vmatpush1.msra.mxu0 0.0
    %1813 = vmatprep.subr.mxu0 0.0
    %1814 = vmatpush1.msra.mxu0 0.0
    %1815 = vmatprep.subr.mxu0 0.0
    %1816 = vmatpush1.msra.mxu0 0.0
    %1817 = vmatprep.subr.mxu0 0.0
    %1818 = vmatpush1.msra.mxu0 0.0
    %1819 = vmatprep.subr.mxu0 0.0
    %1820 = vmatpush1.msra.mxu0 0.0
    %1821 = vmatprep.subr.mxu0 0.0
    %1822 = vmatpush1.msra.mxu0 0.0
    %1823 = vmatprep.subr.mxu0 0.0
    %1824 = vmatpush1.msra.mxu0 0.0
    %1825 = vmatprep.subr.mxu0 0.0
    %1826 = vmatpush1.msra.mxu0 0.0
    %1827 = vmatprep.subr.mxu0 0.0
    %1828 = vmatpush1.msra.mxu0 0.0
    %1829 = vmatprep.subr.mxu0 0.0
    %1830 = vmatpush1.msra.mxu0 0.0
    %1831 = vmatprep.subr.mxu0 0.0
    %1832 = vmatpush1.msra.mxu0 0.0
    %1833 = vmatprep.subr.mxu0 0.0
    %1834 = vmatpush1.msra.mxu0 0.0
    %1835 = vmatprep.subr.mxu0 0.0
    %1836 = vmatpush1.msra.mxu0 0.0
    %1837 = vmatprep.subr.mxu0 0.0
    %1838 = vmatpush1.msra.mxu0 0.0
    %1839 = vmatprep.subr.mxu0 0.0
    %1840 = vmatpush1.msra.mxu0 0.0
    %1841 = vmatprep.mubr.f32.mxu0 0.0
    %1842 = vmatmul.mubr.f32.gmra.mrb[0].mxu0 %v1775
    %v1843 = vpop.f32.mrb[0].mxu0
    %v1844 = vadd.f32 0.0, %v1843
    %v1845 = vpop.f32.mrb[0].mxu0
    %1846 = vdwg.mxu0
    %v1848 = vsel %vm659, %v1770, 0
    %v1851 = vsel %vm659, %v1771, 0
    %v1854 = vsel %vm663, %v1844, 0
    %1856 = vmatprep.subr.mxu0 0.0
    %1857 = vmatpush1.msra.mxu0 %v1854
    %1858 = vmatprep.subr.mxu0 0.0
    %1859 = vmatpush1.msra.mxu0 0.0
    %1860 = vmatprep.subr.mxu0 0.0
    %1861 = vmatpush1.msra.mxu0 0.0
    %1862 = vmatprep.subr.mxu0 0.0
    %1863 = vmatpush1.msra.mxu0 0.0
    %1864 = vmatprep.subr.mxu0 0.0
    %1865 = vmatpush1.msra.mxu0 0.0
    %1866 = vmatprep.subr.mxu0 0.0
    %1867 = vmatpush1.msra.mxu0 0.0
    %1868 = vmatprep.subr.mxu0 0.0
    %1869 = vmatpush1.msra.mxu0 0.0
    %1870 = vmatprep.subr.mxu0 0.0
    %1871 = vmatpush1.msra.mxu0 0.0
    %1872 = vmatprep.subr.mxu0 0.0
    %1873 = vmatpush1.msra.mxu0 0.0
    %1874 = vmatprep.subr.mxu0 0.0
    %1875 = vmatpush1.msra.mxu0 0.0
    %1876 = vmatprep.subr.mxu0 0.0
    %1877 = vmatpush1.msra.mxu0 0.0
    %1878 = vmatprep.subr.mxu0 0.0
    %1879 = vmatpush1.msra.mxu0 0.0
    %1880 = vmatprep.subr.mxu0 0.0
    %1881 = vmatpush1.msra.mxu0 0.0
    %1882 = vmatprep.subr.mxu0 0.0
    %1883 = vmatpush1.msra.mxu0 0.0
    %1884 = vmatprep.subr.mxu0 0.0
    %1885 = vmatpush1.msra.mxu0 0.0
    %1886 = vmatprep.subr.mxu0 0.0
    %1887 = vmatpush1.msra.mxu0 0.0
    %1888 = vmatprep.subr.mxu0 0.0
    %1889 = vmatpush1.msra.mxu0 0.0
    %1890 = vmatprep.subr.mxu0 0.0
    %1891 = vmatpush1.msra.mxu0 0.0
    %1892 = vmatprep.subr.mxu0 0.0
    %1893 = vmatpush1.msra.mxu0 0.0
    %1894 = vmatprep.subr.mxu0 0.0
    %1895 = vmatpush1.msra.mxu0 0.0
    %1896 = vmatprep.subr.mxu0 0.0
    %1897 = vmatpush1.msra.mxu0 0.0
    %1898 = vmatprep.subr.mxu0 0.0
    %1899 = vmatpush1.msra.mxu0 0.0
    %1900 = vmatprep.subr.mxu0 0.0
    %1901 = vmatpush1.msra.mxu0 0.0
    %1902 = vmatprep.subr.mxu0 0.0
    %1903 = vmatpush1.msra.mxu0 0.0
    %1904 = vmatprep.subr.mxu0 0.0
    %1905 = vmatpush1.msra.mxu0 0.0
    %1906 = vmatprep.subr.mxu0 0.0
    %1907 = vmatpush1.msra.mxu0 0.0
    %1908 = vmatprep.subr.mxu0 0.0
    %1909 = vmatpush1.msra.mxu0 0.0
    %1910 = vmatprep.subr.mxu0 0.0
    %1911 = vmatpush1.msra.mxu0 0.0
    %1912 = vmatprep.subr.mxu0 0.0
    %1913 = vmatpush1.msra.mxu0 0.0
    %1914 = vmatprep.subr.mxu0 0.0
    %1915 = vmatpush1.msra.mxu0 0.0
    %1916 = vmatprep.subr.mxu0 0.0
    %1917 = vmatpush1.msra.mxu0 0.0
    %1918 = vmatprep.subr.mxu0 0.0
    %1919 = vmatpush1.msra.mxu0 0.0
    %1920 = vmatprep.mubr.f32.mxu0 0.0
    %1921 = vmatmul.mubr.f32.gmra.mrb[0].mxu0 %v1848
    %v1922 = vpop.f32.mrb[0].mxu0
    %v1923 = vadd.f32 0.0, %v1922
    %v1924 = vpop.f32.mrb[0].mxu0
    %1925 = vmatprep.mubr.f32.mxu0 0.0
    %1926 = vmatmul.mubr.f32.gmra.mrb[0].mxu0 %v1851
    %v1927 = vpop.f32.mrb[0].mxu0
    %v1928 = vadd.f32 0.0, %v1927
    %v1929 = vpop.f32.mrb[0].mxu0
    %1930 = vdwg.mxu0
    %v1931 = vmul.f32 %v1447, %v1923
    %v1932 = vmul.f32 %v1448, %v1928
    %v1933 = vld [vmem:[#allocation2 + $0x380] sm:$0x1]
    %v1934 = vlaneseq
    %v1935 = vshrl.u32 %v1934, 7
    %v1936 = vsub.s32 0, %v1935
    %v1937 = vrot.slane %v1933, %v1936
    %v1938 = vmul.f32 %v1931, %v1937
    %v1939 = vmul.f32 %v1932, %v1937
    %v1940 = vld [vmem:[#allocation2 + $0x388] sm:$0x1]
    %v1941 = vlaneseq
    %v1942 = vshrl.u32 %v1941, 7
    %v1943 = vsub.s32 0, %v1942
    %v1944 = vrot.slane %v1940, %v1943
    %v1945 = vadd.f32 %v1938, %v1944
    %v1946 = vadd.f32 %v1939, %v1944
    %v1947 = vmax.f32 %v1945, 0.0
    %v1948 = vmax.f32 %v1946, 0.0
    %v1949 = vld [vmem:[#allocation2 + $0xf0] sm:$0xff]
    %v1950 = vld [vmem:[#allocation2 + $0xf8] sm:$0xff]
    %v1951 = vld [vmem:[#allocation2 + $0x100] sm:$0xff]
    %v1952 = vld [vmem:[#allocation2 + $0x108] sm:$0xff]
    %v1953 = vld [vmem:[#allocation2 + $0x110] sm:$0xff]
    %v1954 = vld [vmem:[#allocation2 + $0x118] sm:$0xff]
    %v1955 = vld [vmem:[#allocation2 + $0x120] sm:$0xff]
    %v1956 = vld [vmem:[#allocation2 + $0x128] sm:$0xff]
    %v1957 = vld [vmem:[#allocation2 + $0x130] sm:$0xff]
    %v1958 = vld [vmem:[#allocation2 + $0x138] sm:$0xff]
    %v1959 = vld [vmem:[#allocation2 + $0x140] sm:$0xff]
    %v1960 = vld [vmem:[#allocation2 + $0x148] sm:$0xff]
    %v1961 = vld [vmem:[#allocation2 + $0x150] sm:$0xff]
    %v1962 = vld [vmem:[#allocation2 + $0x158] sm:$0xff]
    %v1963 = vld [vmem:[#allocation2 + $0x160] sm:$0xff]
    %v1964 = vld [vmem:[#allocation2 + $0x168] sm:$0xff]
    %1965 = vmatprep.subr.mxu0 0.0
    %1966 = vmatpush1.msra.mxu0 %v1949
    %1967 = vmatprep.subr.mxu0 0.0
    %1968 = vmatpush1.msra.mxu0 %v1950
    %1969 = vmatprep.subr.mxu0 0.0
    %1970 = vmatpush1.msra.mxu0 %v1951
    %1971 = vmatprep.subr.mxu0 0.0
    %1972 = vmatpush1.msra.mxu0 %v1952
    %1973 = vmatprep.subr.mxu0 0.0
    %1974 = vmatpush1.msra.mxu0 %v1953
    %1975 = vmatprep.subr.mxu0 0.0
    %1976 = vmatpush1.msra.mxu0 %v1954
    %1977 = vmatprep.subr.mxu0 0.0
    %1978 = vmatpush1.msra.mxu0 %v1955
    %1979 = vmatprep.subr.mxu0 0.0
    %1980 = vmatpush1.msra.mxu0 %v1956
    %1981 = vmatprep.subr.mxu0 0.0
    %1982 = vmatpush1.msra.mxu0 %v1957
    %1983 = vmatprep.subr.mxu0 0.0
    %1984 = vmatpush1.msra.mxu0 %v1958
    %1985 = vmatprep.subr.mxu0 0.0
    %1986 = vmatpush1.msra.mxu0 %v1959
    %1987 = vmatprep.subr.mxu0 0.0
    %1988 = vmatpush1.msra.mxu0 %v1960
    %1989 = vmatprep.subr.mxu0 0.0
    %1990 = vmatpush1.msra.mxu0 %v1961
    %1991 = vmatprep.subr.mxu0 0.0
    %1992 = vmatpush1.msra.mxu0 %v1962
    %1993 = vmatprep.subr.mxu0 0.0
    %1994 = vmatpush1.msra.mxu0 %v1963
    %1995 = vmatprep.subr.mxu0 0.0
    %1996 = vmatpush1.msra.mxu0 %v1964
    %1997 = vmatprep.subr.mxu0 0.0
    %1998 = vmatpush1.msra.mxu0 0.0
    %1999 = vmatprep.subr.mxu0 0.0
    %2000 = vmatpush1.msra.mxu0 0.0
    %2001 = vmatprep.subr.mxu0 0.0
    %2002 = vmatpush1.msra.mxu0 0.0
    %2003 = vmatprep.subr.mxu0 0.0
    %2004 = vmatpush1.msra.mxu0 0.0
    %2005 = vmatprep.subr.mxu0 0.0
    %2006 = vmatpush1.msra.mxu0 0.0
    %2007 = vmatprep.subr.mxu0 0.0
    %2008 = vmatpush1.msra.mxu0 0.0
    %2009 = vmatprep.subr.mxu0 0.0
    %2010 = vmatpush1.msra.mxu0 0.0
    %2011 = vmatprep.subr.mxu0 0.0
    %2012 = vmatpush1.msra.mxu0 0.0
    %2013 = vmatprep.subr.mxu0 0.0
    %2014 = vmatpush1.msra.mxu0 0.0
    %2015 = vmatprep.subr.mxu0 0.0
    %2016 = vmatpush1.msra.mxu0 0.0
    %2017 = vmatprep.subr.mxu0 0.0
    %2018 = vmatpush1.msra.mxu0 0.0
    %2019 = vmatprep.subr.mxu0 0.0
    %2020 = vmatpush1.msra.mxu0 0.0
    %2021 = vmatprep.subr.mxu0 0.0
    %2022 = vmatpush1.msra.mxu0 0.0
    %2023 = vmatprep.subr.mxu0 0.0
    %2024 = vmatpush1.msra.mxu0 0.0
    %2025 = vmatprep.subr.mxu0 0.0
    %2026 = vmatpush1.msra.mxu0 0.0
    %2027 = vmatprep.subr.mxu0 0.0
    %2028 = vmatpush1.msra.mxu0 0.0
    %2029 = vmatprep.mubr.f32.mxu0 0.0
    %2030 = vmatmul.mubr.f32.gmra.mrb[0].mxu0 %v1947
    %v2031 = vpop.f32.mrb[0].mxu0
    %v2032 = vadd.f32 0.0, %v2031
    %v2033 = vpop.f32.mrb[0].mxu0
    %2034 = vmatprep.mubr.f32.mxu0 0.0
    %2035 = vmatmul.mubr.f32.gmra.mrb[0].mxu0 %v1948
    %v2036 = vpop.f32.mrb[0].mxu0
    %v2037 = vadd.f32 0.0, %v2036
    %v2038 = vpop.f32.mrb[0].mxu0
    %2039 = vdwg.mxu0
    %v2040 = vld [vmem:[#allocation2 + $0x310] sm:$0xff]
    %v2041 = vld [vmem:[#allocation2 + $0x318] sm:$0xff]
    %v2042 = vmul.f32 %v2032, %v2040
    %v2043 = vmul.f32 %v2037, %v2041
    %2044 = vmatprep.subr.mxu0 0.0
    %2045 = vmatpush1.msra.mxu0 %v2042
    %2046 = vmatprep.subr.mxu0 0.0
    %2047 = vmatpush1.msra.mxu0 %v2043
    %2048 = vmatprep.subr.mxu0 0.0
    %2049 = vmatpush1.msra.mxu0 0.0
    %2050 = vmatprep.subr.mxu0 0.0
    %2051 = vmatpush1.msra.mxu0 0.0
    %2052 = vmatprep.subr.mxu0 0.0
    %2053 = vmatpush1.msra.mxu0 0.0
    %2054 = vmatprep.subr.mxu0 0.0
    %2055 = vmatpush1.msra.mxu0 0.0
    %2056 = vmatprep.subr.mxu0 0.0
    %2057 = vmatpush1.msra.mxu0 0.0
    %2058 = vmatprep.subr.mxu0 0.0
    %2059 = vmatpush1.msra.mxu0 0.0
    %2060 = vmatprep.subr.mxu0 0.0
    %2061 = vmatpush1.msra.mxu0 0.0
    %2062 = vmatprep.subr.mxu0 0.0
    %2063 = vmatpush1.msra.mxu0 0.0
    %2064 = vmatprep.subr.mxu0 0.0
    %2065 = vmatpush1.msra.mxu0 0.0
    %2066 = vmatprep.subr.mxu0 0.0
    %2067 = vmatpush1.msra.mxu0 0.0
    %2068 = vmatprep.subr.mxu0 0.0
    %2069 = vmatpush1.msra.mxu0 0.0
    %2070 = vmatprep.subr.mxu0 0.0
    %2071 = vmatpush1.msra.mxu0 0.0
    %2072 = vmatprep.subr.mxu0 0.0
    %2073 = vmatpush1.msra.mxu0 0.0
    %2074 = vmatprep.subr.mxu0 0.0
    %2075 = vmatpush1.msra.mxu0 0.0
    %2076 = vmatprep.subr.mxu0 0.0
    %2077 = vmatpush1.msra.mxu0 0.0
    %2078 = vmatprep.subr.mxu0 0.0
    %2079 = vmatpush1.msra.mxu0 0.0
    %2080 = vmatprep.subr.mxu0 0.0
    %2081 = vmatpush1.msra.mxu0 0.0
    %2082 = vmatprep.subr.mxu0 0.0
    %2083 = vmatpush1.msra.mxu0 0.0
    %2084 = vmatprep.subr.mxu0 0.0
    %2085 = vmatpush1.msra.mxu0 0.0
    %2086 = vmatprep.subr.mxu0 0.0
    %2087 = vmatpush1.msra.mxu0 0.0
    %2088 = vmatprep.subr.mxu0 0.0
    %2089 = vmatpush1.msra.mxu0 0.0
    %2090 = vmatprep.subr.mxu0 0.0
    %2091 = vmatpush1.msra.mxu0 0.0
    %2092 = vmatprep.subr.mxu0 0.0
    %2093 = vmatpush1.msra.mxu0 0.0
    %2094 = vmatprep.subr.mxu0 0.0
    %2095 = vmatpush1.msra.mxu0 0.0
    %2096 = vmatprep.subr.mxu0 0.0
    %2097 = vmatpush1.msra.mxu0 0.0
    %2098 = vmatprep.subr.mxu0 0.0
    %2099 = vmatpush1.msra.mxu0 0.0
    %2100 = vmatprep.subr.mxu0 0.0
    %2101 = vmatpush1.msra.mxu0 0.0
    %2102 = vmatprep.subr.mxu0 0.0
    %2103 = vmatpush1.msra.mxu0 0.0
    %2104 = vmatprep.subr.mxu0 0.0
    %2105 = vmatpush1.msra.mxu0 0.0
    %2106 = vmatprep.subr.mxu0 0.0
    %2107 = vmatpush1.msra.mxu0 0.0
    %2108 = vmatprep.mubr.f32.mxu0 0.0
    %2109 = vmatmul.mubr.f32.gmra.mrb[0].mxu0 %v1452
    %v2110 = vpop.f32.mrb[0].mxu0
    %v2111 = vadd.f32 0.0, %v2110
    %v2112 = vpop.f32.mrb[0].mxu0
    %2113 = vdwg.mxu0
    %v2114 = vld [vmem:[#allocation2 + $0x320] sm:$0xff]
    %v2115 = vld [vmem:[#allocation2 + $0x328] sm:$0xff]
    %v2116 = vld [vmem:[#allocation2 + $0x330] sm:$0xff]
    %v2117 = vld [vmem:[#allocation2 + $0x338] sm:$0xff]
    %v2118 = vld [vmem:[#allocation2 + $0x340] sm:$0xff]
    %v2119 = vld [vmem:[#allocation2 + $0x390] sm:$0x1]
    %v2120 = vlaneseq
    %v2121 = vshrl.u32 %v2120, 7
    %v2122 = vsub.s32 0, %v2121
    %v2123 = vrot.slane %v2119, %v2122
    %vm2124 = vcmask 326656
    %v2126 = vsel %vm2124, %v2111, 0
    %2128 = vmatprep.subr.mxu0 0.0
    %2129 = vmatpush1.msra.mxu0 %v2114
    %2130 = vmatprep.subr.mxu0 0.0
    %2131 = vmatpush1.msra.mxu0 %v2115
    %2132 = vmatprep.subr.mxu0 0.0
    %2133 = vmatpush1.msra.mxu0 %v2116
    %2134 = vmatprep.subr.mxu0 0.0
    %2135 = vmatpush1.msra.mxu0 %v2117
    %2136 = vmatprep.subr.mxu0 0.0
    %2137 = vmatpush1.msra.mxu0 %v2118
    %2138 = vmatprep.subr.mxu0 0.0
    %2139 = vmatpush1.msra.mxu0 0.0
    %2140 = vmatprep.subr.mxu0 0.0
    %2141 = vmatpush1.msra.mxu0 0.0
    %2142 = vmatprep.subr.mxu0 0.0
    %2143 = vmatpush1.msra.mxu0 0.0
    %2144 = vmatprep.subr.mxu0 0.0
    %2145 = vmatpush1.msra.mxu0 0.0
    %2146 = vmatprep.subr.mxu0 0.0
    %2147 = vmatpush1.msra.mxu0 0.0
    %2148 = vmatprep.subr.mxu0 0.0
    %2149 = vmatpush1.msra.mxu0 0.0
    %2150 = vmatprep.subr.mxu0 0.0
    %2151 = vmatpush1.msra.mxu0 0.0
    %2152 = vmatprep.subr.mxu0 0.0
    %2153 = vmatpush1.msra.mxu0 0.0
    %2154 = vmatprep.subr.mxu0 0.0
    %2155 = vmatpush1.msra.mxu0 0.0
    %2156 = vmatprep.subr.mxu0 0.0
    %2157 = vmatpush1.msra.mxu0 0.0
    %2158 = vmatprep.subr.mxu0 0.0
    %2159 = vmatpush1.msra.mxu0 0.0
    %2160 = vmatprep.subr.mxu0 0.0
    %2161 = vmatpush1.msra.mxu0 0.0
    %2162 = vmatprep.subr.mxu0 0.0
    %2163 = vmatpush1.msra.mxu0 0.0
    %2164 = vmatprep.subr.mxu0 0.0
    %2165 = vmatpush1.msra.mxu0 0.0
    %2166 = vmatprep.subr.mxu0 0.0
    %2167 = vmatpush1.msra.mxu0 0.0
    %2168 = vmatprep.subr.mxu0 0.0
    %2169 = vmatpush1.msra.mxu0 0.0
    %2170 = vmatprep.subr.mxu0 0.0
    %2171 = vmatpush1.msra.mxu0 0.0
    %2172 = vmatprep.subr.mxu0 0.0
    %2173 = vmatpush1.msra.mxu0 0.0
    %2174 = vmatprep.subr.mxu0 0.0
    %2175 = vmatpush1.msra.mxu0 0.0
    %2176 = vmatprep.subr.mxu0 0.0
    %2177 = vmatpush1.msra.mxu0 0.0
    %2178 = vmatprep.subr.mxu0 0.0
    %2179 = vmatpush1.msra.mxu0 0.0
    %2180 = vmatprep.subr.mxu0 0.0
    %2181 = vmatpush1.msra.mxu0 0.0
    %2182 = vmatprep.subr.mxu0 0.0
    %2183 = vmatpush1.msra.mxu0 0.0
    %2184 = vmatprep.subr.mxu0 0.0
    %2185 = vmatpush1.msra.mxu0 0.0
    %2186 = vmatprep.subr.mxu0 0.0
    %2187 = vmatpush1.msra.mxu0 0.0
    %2188 = vmatprep.subr.mxu0 0.0
    %2189 = vmatpush1.msra.mxu0 0.0
    %2190 = vmatprep.subr.mxu0 0.0
    %2191 = vmatpush1.msra.mxu0 0.0
    %2192 = vmatprep.mubr.f32.mxu0 0.0
    %2193 = vmatmul.mubr.f32.gmra.mrb[0].mxu0 %v2126
    %v2194 = vpop.f32.mrb[0].mxu0
    %v2195 = vadd.f32 %v2123, %v2194
    %v2196 = vpop.f32.mrb[0].mxu0
    %2197 = vdwg.mxu0
    %vm2198 = vcmask 33792
    %v2199 = vsel %vm2198, %v2195, -inf
    %2200 = vmax.xlane.f32.xlu0 %v2199
    %v2201 = vpop.xlane.xlu0 %2200
    %v2202 = vsub.f32 %v2195, %v2201
    %v2203 = vmul.f32 %v2202, 1.442695
    %v2204 = vpow.pop %v2203
    %v2205 = vsel %vm2198, %v2204, 0.0
    %2206 = vadd.xlane.f32.xlu0 %v2205
    %v2207 = vpop.xlane.xlu0 %2206
    %v2208 = vrcp.pop %v2207
    %v2209 = vmul.f32 %v2204, %v2208
    %2210 = vst.msk [vmem:[#allocation5] sm:$0x3] %vm2198, %v2209
    // Predicated region
    $region14: #{se_forward.1} parent=1 // pred_check
      _
    $region15: #{se_forward.1} parent=1 // pred_check_branch
      %2212 = sbr.rel (0) target = $region17
    $region16: #{se_forward.1} parent=1 // pred_region
      %s2214 = ssub.s32 32, 32
      %2215 = vsyncadd [#allocation4], %s2214
      %s2217 = sshll.u32 [#allocation5], 4
      %s2218 = int_to_ptr.vmem [resolvable:$true] %s2217
      %2220 = dma.vmem_to_hbm [thread:$0]  %s2218, 32, %s2, [#allocation4]
    $region17: #{se_forward.1} parent=1 // pred_fallthru
      _
    // Predicated region
    $region18: #{se_forward.1} parent=1 // pred_check
      _
    $region19: #{se_forward.1} parent=1 // pred_check_branch
      %2222 = sbr.rel (0) target = $region21
    $region20: #{se_forward.1} parent=1 // pred_region
      %2223 = dma.done [#allocation4], 32
    $region21: #{se_forward.1} parent=1 // pred_fallthru
      _
    %2224 = vsyncpa [#allocation3], 1
    %2225 = vsyncpa [#allocation4], 1

</llo_original>
